<compile_context>
chip_gen: v6e
topology: v6e:2x2x1
jax: 0.10.0
libtpu: 0.0.40
codegen_flags: <defaults>
</compile_context>

<pallas_src>
import functools

import jax
import jax.numpy as jnp
import numpy as np
from jax.experimental import pallas as pl
from jax.experimental.pallas import tpu as pltpu


# --------------------------------------------------------------------------
# Fused kernel: serial LSTM recurrence + per-step projection/log-softmax.
# --------------------------------------------------------------------------
def _lstm_tag_fused_kernel(gx_ref, whh_t_ref, wc_ref, bc_ref, out_ref,
                           h_ref, c_ref, *, unroll):
    """Grid = (batch_block [parallel], time_chunk [arbitrary/serial]).

    gx_ref   : (T_CHUNK, B_BLOCK, 4H)  precomputed input projection
    whh_t_ref: (H, 4H)                 hidden->gates weight (pre-transposed)
    wc_ref   : (H, NT_PAD)             folded + lane-padded conv weight
    bc_ref   : (1, NT_PAD)             lane-padded conv bias (-1e30 pad lanes)
    out_ref  : (T_CHUNK, B_BLOCK, NT_PAD)  log-probs (lane-dense store)
    h_ref/c_ref: (B_BLOCK, H) VMEM scratch, persists across time chunks.
    """
    @pl.when(pl.program_id(1) == 0)          # first time-chunk of this batch block
    def _():
        h_ref[...] = jnp.zeros_like(h_ref)
        c_ref[...] = jnp.zeros_like(c_ref)

    H = h_ref.shape[1]
    T = gx_ref.shape[0]
    # Invariant loads / casts hoisted out of the time loop.
    whh_t = whh_t_ref[...].astype(jnp.bfloat16)   # bf16 MXU operand
    wc = wc_ref[...]
    bc = bc_ref[...]

    def step(t, carry):
        h, c = carry
        # Only the recurrent matmul sits on the serial critical path
        # (x-projection hoisted to the wrapper).  bf16 operands, f32 acc.
        gates = gx_ref[t] + jnp.dot(h.astype(jnp.bfloat16), whh_t,
                                    preferred_element_type=jnp.float32)
        # Two full-vreg EUP pushes instead of four 32-lane ones.
        sig = jax.nn.sigmoid(gates)
        th = jnp.tanh(gates)
        i_g = sig[:, 0 * H:1 * H]
        f_g = sig[:, 1 * H:2 * H]
        o_g = sig[:, 3 * H:4 * H]
        g_g = th[:, 2 * H:3 * H]
        c_new = f_g * c + i_g * g_g
        h_new = o_g * jnp.tanh(c_new)

        # Fused epilogue (off the h/c dependence chain): conv projection +
        # log-softmax, written as an unmasked lane-dense (B_BLOCK, 128) store.
        logits = jnp.dot(h_new, wc, preferred_element_type=jnp.float32) + bc
        m = jnp.max(logits, axis=-1, keepdims=True)
        z = logits - m
        lse = jnp.log(jnp.sum(jnp.exp(z), axis=-1, keepdims=True))
        out_ref[t] = (z - lse).astype(out_ref.dtype)
        return (h_new, c_new)

    # h/c stay in vregs inside the chunk; VMEM scratch only at chunk edges.
    h_f, c_f = jax.lax.fori_loop(0, T, step, (h_ref[...], c_ref[...]),
                                 unroll=unroll)
    h_ref[...] = h_f
    c_ref[...] = c_f


# --------------------------------------------------------------------------
# Sizing helpers.
# --------------------------------------------------------------------------
def _round_up(x, m):
    return ((x + m - 1) // m) * m


def _choose_time_chunk(S, b_block, h, nt_pad, budget_bytes=24 << 20):
    """Largest chunk <= 16 whose double-buffered in/out blocks fit the budget;
    pads S up to a multiple of the chunk (no degradation for prime/odd S)."""
    n_chunks = max(1, (S + 15) // 16)
    while True:
        t = -(-S // n_chunks)                       # ceil(S / n_chunks)
        blk_bytes = 2 * t * b_block * (4 * h + nt_pad) * 4   # 2x: double buffer
        if blk_bytes <= budget_bytes or t == 1:
            return t, n_chunks * t
        n_chunks += 1


def _pick_unroll(t_chunk, b_block, h):
    """Bound the unroll so live per-step state stays under ~48 vregs."""
    vregs_gate = max(1, (b_block * 4 * h * 4) // 4096)    # gates / sig / tanh
    vregs_state = max(1, (b_block * h * 4) // 4096)       # h, c
    per_step = 3 * vregs_gate + 2 * vregs_state
    return max(1, min(t_chunk, 48 // per_step))


# --------------------------------------------------------------------------
# Wrapper.
# --------------------------------------------------------------------------
def lstm_tag_forward(tokens, emb_table, w_ih, w_hh, w_conv, b_conv):
    """tokens: (S, B) int32.  Returns (S, B, ntag) float32 log-probs."""
    S, B = tokens.shape
    E = emb_table.shape[1]
    H = w_hh.shape[1]
    ntag = w_conv.shape[0]

    # ---- padding / tiling decisions ----
    B_pad = _round_up(B, 8)                                  # f32 sublane tile
    n_b_blocks = 2 if (B_pad >= 16 and B_pad % 16 == 0) else 1   # v7x megacore
    B_BLOCK = B_pad // n_b_blocks
    NT_PAD = max(128, _round_up(ntag, 128))                  # lane-dense output
    T_CHUNK, S_pad = _choose_time_chunk(S, B_BLOCK, H, NT_PAD)
    unroll = _pick_unroll(T_CHUNK, B_BLOCK, H)

    # ---- plain-JAX glue (all off the serial critical path) ----
    emb = jnp.take(emb_table, tokens, axis=0)                # (S, B, E)
    # Hoisted input projection: one large MXU-friendly matmul, bf16 operands,
    # f32 result (kept f32 so in-kernel gate math stays f32 on every gen).
    gates_x = jnp.dot(emb.reshape(S * B, E).astype(jnp.bfloat16),
                      w_ih.T.astype(jnp.bfloat16),
                      preferred_element_type=jnp.float32).reshape(S, B, 4 * H)
    gates_x = jnp.pad(gates_x, ((0, S_pad - S), (0, B_pad - B), (0, 0)))

    whh_t = w_hh.T                                           # (H, 4H)
    # Fold the [h, h] concat into the conv weight: (2H, ntag) -> (H, ntag),
    # then lane-pad to NT_PAD (zero weight columns, -1e30 bias lanes so the
    # log-softmax over 128 lanes is exact for the real columns).
    wc_full = w_conv.reshape(ntag, 2 * H).T                  # (2H, ntag)
    wc_fold = wc_full[:H] + wc_full[H:]                      # (H, ntag)
    wc_pad = jnp.zeros((H, NT_PAD), jnp.float32).at[:, :ntag].set(wc_fold)
    bc_pad = jnp.full((1, NT_PAD), -1e30, jnp.float32).at[0, :ntag].set(b_conv)

    # ---- VMEM budget / limit (v7x: 64 MiB physical, 32 MiB scoped default) --
    weight_bytes = (H * 4 * H + H * NT_PAD + NT_PAD) * 4
    block_bytes = 2 * T_CHUNK * B_BLOCK * (4 * H + NT_PAD) * 4
    scratch_bytes = 2 * B_BLOCK * H * 4
    est = 2 * weight_bytes + block_bytes + scratch_bytes
    vmem_limit_bytes = int(min(48 << 20, max(8 << 20, 4 * est)))

    kernel = functools.partial(_lstm_tag_fused_kernel, unroll=unroll)

    grid_spec = pltpu.PrefetchScalarGridSpec(
        num_scalar_prefetch=0,
        grid=(n_b_blocks, S_pad // T_CHUNK),
        in_specs=[
            pl.BlockSpec((T_CHUNK, B_BLOCK, 4 * H), lambda b, s: (s, b, 0)),
            pl.BlockSpec((H, 4 * H), lambda b, s: (0, 0)),
            pl.BlockSpec((H, NT_PAD), lambda b, s: (0, 0)),
            pl.BlockSpec((1, NT_PAD), lambda b, s: (0, 0)),
        ],
        out_specs=pl.BlockSpec((T_CHUNK, B_BLOCK, NT_PAD),
                               lambda b, s: (s, b, 0)),
        scratch_shapes=[
            pltpu.VMEM((B_BLOCK, H), jnp.float32),   # h state (persists)
            pltpu.VMEM((B_BLOCK, H), jnp.float32),   # c state (persists)
        ],
    )

    out_padded = pl.pallas_call(
        kernel,
        out_shape=jax.ShapeDtypeStruct((S_pad, B_pad, NT_PAD), jnp.float32),
        grid_spec=grid_spec,
        compiler_params=pltpu.CompilerParams(
            dimension_semantics=("parallel", "arbitrary"),
            vmem_limit_bytes=vmem_limit_bytes),
    )(gates_x, whh_t, wc_pad, bc_pad)

    # Strip batch / time / lane padding.
    return out_padded[:S, :B, :ntag]


# --------------------------------------------------------------------------
# Pure-JAX reference mirroring the PyTorch forward (eval mode, f32).
# --------------------------------------------------------------------------
def lstm_tag_reference(tokens, emb_table, w_ih, w_hh, w_conv, b_conv):
    S, B = tokens.shape
    H = w_hh.shape[1]
    ntag = w_conv.shape[0]
    emb = jnp.take(emb_table, tokens, axis=0)

    def step(carry, x_t):
        h, c = carry
        gates = x_t @ w_ih.T + h @ w_hh.T
        i = jax.nn.sigmoid(gates[:, 0 * H:1 * H])
        f = jax.nn.sigmoid(gates[:, 1 * H:2 * H])
        g = jnp.tanh(gates[:, 2 * H:3 * H])
        o = jax.nn.sigmoid(gates[:, 3 * H:4 * H])
        c = f * c + i * g
        h = o * jnp.tanh(c)
        return (h, c), h

    h0 = jnp.zeros((B, H), jnp.float32)
    (_, _), outs = jax.lax.scan(step, (h0, h0), emb)        # (S, B, H)
    bi = jnp.concatenate([outs, outs], axis=-1)             # (S, B, 2H)
    logits = bi @ w_conv.reshape(ntag, 2 * H).T + b_conv    # (S, B, ntag)
    return jax.nn.log_softmax(logits, axis=-1)


if __name__ == "__main__":
    # Small shapes consistent with the module.
    input_ntoken = 50
    emb_size = 32
    hidden_size = 32
    ntag = 16
    seq_len = 8
    batch = 4
    initrange = 0.1

    key = jax.random.PRNGKey(0)
    k_tok, k_emb, k_ih, k_hh, k_cw, k_cb = jax.random.split(key, 6)

    tokens = jax.random.randint(k_tok, (seq_len, batch), 0, input_ntoken,
                                dtype=jnp.int32)
    # init_weights(initrange): uniform(-initrange, initrange) for all params.
    emb_table = jax.random.uniform(k_emb, (input_ntoken, emb_size),
                                   jnp.float32, -initrange, initrange)
    w_ih = jax.random.uniform(k_ih, (4 * hidden_size, emb_size),
                              jnp.float32, -initrange, initrange)
    w_hh = jax.random.uniform(k_hh, (4 * hidden_size, hidden_size),
                              jnp.float32, -initrange, initrange)
    w_conv = jax.random.uniform(k_cw, (ntag, 1, 1, 2 * hidden_size),
                                jnp.float32, -initrange, initrange)
    b_conv = jax.random.uniform(k_cb, (ntag,),
                                jnp.float32, -initrange, initrange)

    out = lstm_tag_forward(tokens, emb_table, w_ih, w_hh, w_conv, b_conv)
    out = jax.block_until_ready(out)

    ref = lstm_tag_reference(tokens, emb_table, w_ih, w_hh, w_conv, b_conv)
    # bf16 MXU operands (f32 accumulate) on the input/recurrent matmuls:
    # tolerance relaxed vs. the pure-f32 reference.
    np.testing.assert_allclose(np.asarray(out), np.asarray(ref),
                               rtol=2e-2, atol=2e-2)
    assert out.shape == (seq_len, batch, ntag)
    assert np.all(np.isfinite(np.asarray(out)))

    print("KERNEL_OK")
</pallas_src>

<mosaic_0001>
module attributes {stable_mosaic.version = 11 : i64} {
  func.func @_lstm_tag_fused_kernel(%arg0: i32, %arg1: i32, %arg2: memref<8x8x128xf32, #tpu.memory_space<vmem>>, %arg3: memref<32x128xf32, #tpu.memory_space<vmem>>, %arg4: memref<32x128xf32, #tpu.memory_space<vmem>>, %arg5: memref<1x128xf32, #tpu.memory_space<vmem>>, %arg6: memref<8x8x128xf32, #tpu.memory_space<vmem>>, %arg7: memref<8x32xf32, #tpu.memory_space<vmem>>, %arg8: memref<8x32xf32, #tpu.memory_space<vmem>>) attributes {dimension_semantics = [#tpu.dimension_semantics<parallel>, #tpu.dimension_semantics<arbitrary>], iteration_bounds = array<i64: 1, 1>, scalar_prefetch = 0 : i64, scratch_operands = 2 : i64, tpu.core_type = #tpu.core_type<tc>, window_params = [{transform_indices = @transform_0, window_bounds = array<i64: 8, 8, 128>}, {pipeline_mode = #tpu.pipeline_mode<synchronous>, transform_indices = @transform_1, window_bounds = array<i64: 32, 128>}, {pipeline_mode = #tpu.pipeline_mode<synchronous>, transform_indices = @transform_2, window_bounds = array<i64: 32, 128>}, {pipeline_mode = #tpu.pipeline_mode<synchronous>, transform_indices = @transform_3, window_bounds = array<i64: 1, 128>}, {transform_indices = @transform_4, window_bounds = array<i64: 8, 8, 128>}]} {
    %c0_i32 = arith.constant 0 : i32
    %0 = arith.cmpi eq, %arg1, %c0_i32 : i32
    %1 = arith.extui %0 : i1 to i32
    %c0_i32_0 = arith.constant 0 : i32
    %2 = arith.cmpi ne, %1, %c0_i32_0 : i32
    scf.if %2 {
      %cst_86 = arith.constant 0.000000e+00 : f32
      %315 = vector.broadcast %cst_86 : f32 to vector<8x32xf32>
      %c0_87 = arith.constant 0 : index
      %c0_88 = arith.constant 0 : index
      %316 = vector.load %arg7[%c0_87, %c0_88] : memref<8x32xf32, #tpu.memory_space<vmem>>, vector<8x32xf32>
      tpu.vector_store %arg7[%c0_87, %c0_88], %315 {strides = array<i32>} : memref<8x32xf32, #tpu.memory_space<vmem>>, vector<8x32xf32>,
      %cst_89 = arith.constant 0.000000e+00 : f32
      %317 = vector.broadcast %cst_89 : f32 to vector<8x32xf32>
      %c0_90 = arith.constant 0 : index
      %c0_91 = arith.constant 0 : index
      %318 = vector.load %arg8[%c0_90, %c0_91] : memref<8x32xf32, #tpu.memory_space<vmem>>, vector<8x32xf32>
      tpu.vector_store %arg8[%c0_90, %c0_91], %317 {strides = array<i32>} : memref<8x32xf32, #tpu.memory_space<vmem>>, vector<8x32xf32>,
    } else {
    }
    %c0 = arith.constant 0 : index
    %c0_1 = arith.constant 0 : index
    %3 = vector.load %arg3[%c0, %c0_1] : memref<32x128xf32, #tpu.memory_space<vmem>>, vector<32x128xf32>
    %4 = arith.truncf %3 : vector<32x128xf32> to vector<32x128xbf16>
    %c0_2 = arith.constant 0 : index
    %c0_3 = arith.constant 0 : index
    %5 = vector.load %arg4[%c0_2, %c0_3] : memref<32x128xf32, #tpu.memory_space<vmem>>, vector<32x128xf32>
    %c0_4 = arith.constant 0 : index
    %c0_5 = arith.constant 0 : index
    %6 = vector.load %arg5[%c0_4, %c0_5] : memref<1x128xf32, #tpu.memory_space<vmem>>, vector<1x128xf32>
    %c0_6 = arith.constant 0 : index
    %c0_7 = arith.constant 0 : index
    %7 = vector.load %arg7[%c0_6, %c0_7] : memref<8x32xf32, #tpu.memory_space<vmem>>, vector<8x32xf32>
    %c0_8 = arith.constant 0 : index
    %c0_9 = arith.constant 0 : index
    %8 = vector.load %arg8[%c0_8, %c0_9] : memref<8x32xf32, #tpu.memory_space<vmem>>, vector<8x32xf32>
    %c0_i32_10 = arith.constant 0 : i32
    %9 = arith.index_cast %c0_i32_10 : i32 to index
    %c0_11 = arith.constant 0 : index
    %c0_12 = arith.constant 0 : index
    %10 = vector.load %arg2[%9, %c0_11, %c0_12] : memref<8x8x128xf32, #tpu.memory_space<vmem>>, vector<1x8x128xf32>
    %11 = vector.shape_cast %10 : vector<1x8x128xf32> to vector<8x128xf32>
    %12 = arith.truncf %7 : vector<8x32xf32> to vector<8x32xbf16>
    %cst = arith.constant dense<0.000000e+00> : vector<8x128xf32>
    %13 = tpu.matmul %12, %4, %cst {dimension_numbers = #tpu.dot_dimension_numbers<[1], [0], [0], [1], [0, 0, 1, 1], [], []>} : vector<8x32xbf16>, vector<32x128xbf16>, vector<8x128xf32> -> vector<8x128xf32>
    %14 = arith.addf %11, %13 : vector<8x128xf32>
    %15 = arith.negf %14 : vector<8x128xf32>
    %16 = math.exp %15 : vector<8x128xf32>
    %cst_13 = arith.constant 1.000000e+00 : f32
    %17 = vector.broadcast %cst_13 : f32 to vector<8x128xf32>
    %18 = arith.addf %17, %16 : vector<8x128xf32>
    %19 = arith.divf %17, %18 : vector<8x128xf32>
    %20 = math.tanh %14 : vector<8x128xf32>
    %21 = vector.extract_strided_slice %19 {offsets = [0, 0], sizes = [8, 32], strides = [1, 1]} : vector<8x128xf32> to vector<8x32xf32>
    %22 = vector.extract_strided_slice %19 {offsets = [0, 32], sizes = [8, 32], strides = [1, 1]} : vector<8x128xf32> to vector<8x32xf32>
    %23 = vector.extract_strided_slice %19 {offsets = [0, 96], sizes = [8, 32], strides = [1, 1]} : vector<8x128xf32> to vector<8x32xf32>
    %24 = vector.extract_strided_slice %20 {offsets = [0, 64], sizes = [8, 32], strides = [1, 1]} : vector<8x128xf32> to vector<8x32xf32>
    %25 = arith.mulf %22, %8 : vector<8x32xf32>
    %26 = arith.mulf %21, %24 : vector<8x32xf32>
    %27 = arith.addf %25, %26 : vector<8x32xf32>
    %28 = math.tanh %27 : vector<8x32xf32>
    %29 = arith.mulf %23, %28 : vector<8x32xf32>
    %cst_14 = arith.constant dense<0.000000e+00> : vector<8x128xf32>
    %30 = tpu.matmul %29, %5, %cst_14 {dimension_numbers = #tpu.dot_dimension_numbers<[1], [0], [0], [1], [0, 0, 1, 1], [], []>} : vector<8x32xf32>, vector<32x128xf32>, vector<8x128xf32> -> vector<8x128xf32>
    %31 = vector.broadcast %6 : vector<1x128xf32> to vector<8x128xf32>
    %32 = arith.addf %30, %31 : vector<8x128xf32>
    %cst_15 = arith.constant dense<0xFF800000> : vector<8xf32>
    %33 = vector.multi_reduction <maximumf>, %32, %cst_15 [1] : vector<8x128xf32> to vector<8xf32>
    %34 = vector.shape_cast %33 : vector<8xf32> to vector<8x1xf32>
    %35 = vector.broadcast %34 : vector<8x1xf32> to vector<8x128xf32>
    %36 = arith.subf %32, %35 : vector<8x128xf32>
    %37 = math.exp %36 : vector<8x128xf32>
    %cst_16 = arith.constant dense<0.000000e+00> : vector<8xf32>
    %38 = vector.multi_reduction <add>, %37, %cst_16 [1] : vector<8x128xf32> to vector<8xf32>
    %39 = vector.shape_cast %38 : vector<8xf32> to vector<8x1xf32>
    %40 = math.log %39 : vector<8x1xf32>
    %41 = vector.broadcast %40 : vector<8x1xf32> to vector<8x128xf32>
    %42 = arith.subf %36, %41 : vector<8x128xf32>
    %43 = arith.index_cast %c0_i32_10 : i32 to index
    %c0_17 = arith.constant 0 : index
    %c0_18 = arith.constant 0 : index
    %44 = vector.load %arg6[%43, %c0_17, %c0_18] : memref<8x8x128xf32, #tpu.memory_space<vmem>>, vector<1x8x128xf32>
    %45 = vector.shape_cast %44 : vector<1x8x128xf32> to vector<8x128xf32>
    %46 = vector.shape_cast %42 : vector<8x128xf32> to vector<1x8x128xf32>
    tpu.vector_store %arg6[%43, %c0_17, %c0_18], %46 {strides = array<i32>} : memref<8x8x128xf32, #tpu.memory_space<vmem>>, vector<1x8x128xf32>,
    %c1_i32 = arith.constant 1 : i32
    %47 = arith.index_cast %c1_i32 : i32 to index
    %c0_19 = arith.constant 0 : index
    %c0_20 = arith.constant 0 : index
    %48 = vector.load %arg2[%47, %c0_19, %c0_20] : memref<8x8x128xf32, #tpu.memory_space<vmem>>, vector<1x8x128xf32>
    %49 = vector.shape_cast %48 : vector<1x8x128xf32> to vector<8x128xf32>
    %50 = arith.truncf %29 : vector<8x32xf32> to vector<8x32xbf16>
    %cst_21 = arith.constant dense<0.000000e+00> : vector<8x128xf32>
    %51 = tpu.matmul %50, %4, %cst_21 {dimension_numbers = #tpu.dot_dimension_numbers<[1], [0], [0], [1], [0, 0, 1, 1], [], []>} : vector<8x32xbf16>, vector<32x128xbf16>, vector<8x128xf32> -> vector<8x128xf32>
    %52 = arith.addf %49, %51 : vector<8x128xf32>
    %53 = arith.negf %52 : vector<8x128xf32>
    %54 = math.exp %53 : vector<8x128xf32>
    %cst_22 = arith.constant 1.000000e+00 : f32
    %55 = vector.broadcast %cst_22 : f32 to vector<8x128xf32>
    %56 = arith.addf %55, %54 : vector<8x128xf32>
    %57 = arith.divf %55, %56 : vector<8x128xf32>
    %58 = math.tanh %52 : vector<8x128xf32>
    %59 = vector.extract_strided_slice %57 {offsets = [0, 0], sizes = [8, 32], strides = [1, 1]} : vector<8x128xf32> to vector<8x32xf32>
    %60 = vector.extract_strided_slice %57 {offsets = [0, 32], sizes = [8, 32], strides = [1, 1]} : vector<8x128xf32> to vector<8x32xf32>
    %61 = vector.extract_strided_slice %57 {offsets = [0, 96], sizes = [8, 32], strides = [1, 1]} : vector<8x128xf32> to vector<8x32xf32>
    %62 = vector.extract_strided_slice %58 {offsets = [0, 64], sizes = [8, 32], strides = [1, 1]} : vector<8x128xf32> to vector<8x32xf32>
    %63 = arith.mulf %60, %27 : vector<8x32xf32>
    %64 = arith.mulf %59, %62 : vector<8x32xf32>
    %65 = arith.addf %63, %64 : vector<8x32xf32>
    %66 = math.tanh %65 : vector<8x32xf32>
    %67 = arith.mulf %61, %66 : vector<8x32xf32>
    %cst_23 = arith.constant dense<0.000000e+00> : vector<8x128xf32>
    %68 = tpu.matmul %67, %5, %cst_23 {dimension_numbers = #tpu.dot_dimension_numbers<[1], [0], [0], [1], [0, 0, 1, 1], [], []>} : vector<8x32xf32>, vector<32x128xf32>, vector<8x128xf32> -> vector<8x128xf32>
    %69 = vector.broadcast %6 : vector<1x128xf32> to vector<8x128xf32>
    %70 = arith.addf %68, %69 : vector<8x128xf32>
    %cst_24 = arith.constant dense<0xFF800000> : vector<8xf32>
    %71 = vector.multi_reduction <maximumf>, %70, %cst_24 [1] : vector<8x128xf32> to vector<8xf32>
    %72 = vector.shape_cast %71 : vector<8xf32> to vector<8x1xf32>
    %73 = vector.broadcast %72 : vector<8x1xf32> to vector<8x128xf32>
    %74 = arith.subf %70, %73 : vector<8x128xf32>
    %75 = math.exp %74 : vector<8x128xf32>
    %cst_25 = arith.constant dense<0.000000e+00> : vector<8xf32>
    %76 = vector.multi_reduction <add>, %75, %cst_25 [1] : vector<8x128xf32> to vector<8xf32>
    %77 = vector.shape_cast %76 : vector<8xf32> to vector<8x1xf32>
    %78 = math.log %77 : vector<8x1xf32>
    %79 = vector.broadcast %78 : vector<8x1xf32> to vector<8x128xf32>
    %80 = arith.subf %74, %79 : vector<8x128xf32>
    %81 = arith.index_cast %c1_i32 : i32 to index
    %c0_26 = arith.constant 0 : index
    %c0_27 = arith.constant 0 : index
    %82 = vector.load %arg6[%81, %c0_26, %c0_27] : memref<8x8x128xf32, #tpu.memory_space<vmem>>, vector<1x8x128xf32>
    %83 = vector.shape_cast %82 : vector<1x8x128xf32> to vector<8x128xf32>
    %84 = vector.shape_cast %80 : vector<8x128xf32> to vector<1x8x128xf32>
    tpu.vector_store %arg6[%81, %c0_26, %c0_27], %84 {strides = array<i32>} : memref<8x8x128xf32, #tpu.memory_space<vmem>>, vector<1x8x128xf32>,
    %c2_i32 = arith.constant 2 : i32
    %85 = arith.index_cast %c2_i32 : i32 to index
    %c0_28 = arith.constant 0 : index
    %c0_29 = arith.constant 0 : index
    %86 = vector.load %arg2[%85, %c0_28, %c0_29] : memref<8x8x128xf32, #tpu.memory_space<vmem>>, vector<1x8x128xf32>
    %87 = vector.shape_cast %86 : vector<1x8x128xf32> to vector<8x128xf32>
    %88 = arith.truncf %67 : vector<8x32xf32> to vector<8x32xbf16>
    %cst_30 = arith.constant dense<0.000000e+00> : vector<8x128xf32>
    %89 = tpu.matmul %88, %4, %cst_30 {dimension_numbers = #tpu.dot_dimension_numbers<[1], [0], [0], [1], [0, 0, 1, 1], [], []>} : vector<8x32xbf16>, vector<32x128xbf16>, vector<8x128xf32> -> vector<8x128xf32>
    %90 = arith.addf %87, %89 : vector<8x128xf32>
    %91 = arith.negf %90 : vector<8x128xf32>
    %92 = math.exp %91 : vector<8x128xf32>
    %cst_31 = arith.constant 1.000000e+00 : f32
    %93 = vector.broadcast %cst_31 : f32 to vector<8x128xf32>
    %94 = arith.addf %93, %92 : vector<8x128xf32>
    %95 = arith.divf %93, %94 : vector<8x128xf32>
    %96 = math.tanh %90 : vector<8x128xf32>
    %97 = vector.extract_strided_slice %95 {offsets = [0, 0], sizes = [8, 32], strides = [1, 1]} : vector<8x128xf32> to vector<8x32xf32>
    %98 = vector.extract_strided_slice %95 {offsets = [0, 32], sizes = [8, 32], strides = [1, 1]} : vector<8x128xf32> to vector<8x32xf32>
    %99 = vector.extract_strided_slice %95 {offsets = [0, 96], sizes = [8, 32], strides = [1, 1]} : vector<8x128xf32> to vector<8x32xf32>
    %100 = vector.extract_strided_slice %96 {offsets = [0, 64], sizes = [8, 32], strides = [1, 1]} : vector<8x128xf32> to vector<8x32xf32>
    %101 = arith.mulf %98, %65 : vector<8x32xf32>
    %102 = arith.mulf %97, %100 : vector<8x32xf32>
    %103 = arith.addf %101, %102 : vector<8x32xf32>
    %104 = math.tanh %103 : vector<8x32xf32>
    %105 = arith.mulf %99, %104 : vector<8x32xf32>
    %cst_32 = arith.constant dense<0.000000e+00> : vector<8x128xf32>
    %106 = tpu.matmul %105, %5, %cst_32 {dimension_numbers = #tpu.dot_dimension_numbers<[1], [0], [0], [1], [0, 0, 1, 1], [], []>} : vector<8x32xf32>, vector<32x128xf32>, vector<8x128xf32> -> vector<8x128xf32>
    %107 = vector.broadcast %6 : vector<1x128xf32> to vector<8x128xf32>
    %108 = arith.addf %106, %107 : vector<8x128xf32>
    %cst_33 = arith.constant dense<0xFF800000> : vector<8xf32>
    %109 = vector.multi_reduction <maximumf>, %108, %cst_33 [1] : vector<8x128xf32> to vector<8xf32>
    %110 = vector.shape_cast %109 : vector<8xf32> to vector<8x1xf32>
    %111 = vector.broadcast %110 : vector<8x1xf32> to vector<8x128xf32>
    %112 = arith.subf %108, %111 : vector<8x128xf32>
    %113 = math.exp %112 : vector<8x128xf32>
    %cst_34 = arith.constant dense<0.000000e+00> : vector<8xf32>
    %114 = vector.multi_reduction <add>, %113, %cst_34 [1] : vector<8x128xf32> to vector<8xf32>
    %115 = vector.shape_cast %114 : vector<8xf32> to vector<8x1xf32>
    %116 = math.log %115 : vector<8x1xf32>
    %117 = vector.broadcast %116 : vector<8x1xf32> to vector<8x128xf32>
    %118 = arith.subf %112, %117 : vector<8x128xf32>
    %119 = arith.index_cast %c2_i32 : i32 to index
    %c0_35 = arith.constant 0 : index
    %c0_36 = arith.constant 0 : index
    %120 = vector.load %arg6[%119, %c0_35, %c0_36] : memref<8x8x128xf32, #tpu.memory_space<vmem>>, vector<1x8x128xf32>
    %121 = vector.shape_cast %120 : vector<1x8x128xf32> to vector<8x128xf32>
    %122 = vector.shape_cast %118 : vector<8x128xf32> to vector<1x8x128xf32>
    tpu.vector_store %arg6[%119, %c0_35, %c0_36], %122 {strides = array<i32>} : memref<8x8x128xf32, #tpu.memory_space<vmem>>, vector<1x8x128xf32>,
    %c3_i32 = arith.constant 3 : i32
    %123 = arith.index_cast %c3_i32 : i32 to index
    %c0_37 = arith.constant 0 : index
    %c0_38 = arith.constant 0 : index
    %124 = vector.load %arg2[%123, %c0_37, %c0_38] : memref<8x8x128xf32, #tpu.memory_space<vmem>>, vector<1x8x128xf32>
    %125 = vector.shape_cast %124 : vector<1x8x128xf32> to vector<8x128xf32>
    %126 = arith.truncf %105 : vector<8x32xf32> to vector<8x32xbf16>
    %cst_39 = arith.constant dense<0.000000e+00> : vector<8x128xf32>
    %127 = tpu.matmul %126, %4, %cst_39 {dimension_numbers = #tpu.dot_dimension_numbers<[1], [0], [0], [1], [0, 0, 1, 1], [], []>} : vector<8x32xbf16>, vector<32x128xbf16>, vector<8x128xf32> -> vector<8x128xf32>
    %128 = arith.addf %125, %127 : vector<8x128xf32>
    %129 = arith.negf %128 : vector<8x128xf32>
    %130 = math.exp %129 : vector<8x128xf32>
    %cst_40 = arith.constant 1.000000e+00 : f32
    %131 = vector.broadcast %cst_40 : f32 to vector<8x128xf32>
    %132 = arith.addf %131, %130 : vector<8x128xf32>
    %133 = arith.divf %131, %132 : vector<8x128xf32>
    %134 = math.tanh %128 : vector<8x128xf32>
    %135 = vector.extract_strided_slice %133 {offsets = [0, 0], sizes = [8, 32], strides = [1, 1]} : vector<8x128xf32> to vector<8x32xf32>
    %136 = vector.extract_strided_slice %133 {offsets = [0, 32], sizes = [8, 32], strides = [1, 1]} : vector<8x128xf32> to vector<8x32xf32>
    %137 = vector.extract_strided_slice %133 {offsets = [0, 96], sizes = [8, 32], strides = [1, 1]} : vector<8x128xf32> to vector<8x32xf32>
    %138 = vector.extract_strided_slice %134 {offsets = [0, 64], sizes = [8, 32], strides = [1, 1]} : vector<8x128xf32> to vector<8x32xf32>
    %139 = arith.mulf %136, %103 : vector<8x32xf32>
    %140 = arith.mulf %135, %138 : vector<8x32xf32>
    %141 = arith.addf %139, %140 : vector<8x32xf32>
    %142 = math.tanh %141 : vector<8x32xf32>
    %143 = arith.mulf %137, %142 : vector<8x32xf32>
    %cst_41 = arith.constant dense<0.000000e+00> : vector<8x128xf32>
    %144 = tpu.matmul %143, %5, %cst_41 {dimension_numbers = #tpu.dot_dimension_numbers<[1], [0], [0], [1], [0, 0, 1, 1], [], []>} : vector<8x32xf32>, vector<32x128xf32>, vector<8x128xf32> -> vector<8x128xf32>
    %145 = vector.broadcast %6 : vector<1x128xf32> to vector<8x128xf32>
    %146 = arith.addf %144, %145 : vector<8x128xf32>
    %cst_42 = arith.constant dense<0xFF800000> : vector<8xf32>
    %147 = vector.multi_reduction <maximumf>, %146, %cst_42 [1] : vector<8x128xf32> to vector<8xf32>
    %148 = vector.shape_cast %147 : vector<8xf32> to vector<8x1xf32>
    %149 = vector.broadcast %148 : vector<8x1xf32> to vector<8x128xf32>
    %150 = arith.subf %146, %149 : vector<8x128xf32>
    %151 = math.exp %150 : vector<8x128xf32>
    %cst_43 = arith.constant dense<0.000000e+00> : vector<8xf32>
    %152 = vector.multi_reduction <add>, %151, %cst_43 [1] : vector<8x128xf32> to vector<8xf32>
    %153 = vector.shape_cast %152 : vector<8xf32> to vector<8x1xf32>
    %154 = math.log %153 : vector<8x1xf32>
    %155 = vector.broadcast %154 : vector<8x1xf32> to vector<8x128xf32>
    %156 = arith.subf %150, %155 : vector<8x128xf32>
    %157 = arith.index_cast %c3_i32 : i32 to index
    %c0_44 = arith.constant 0 : index
    %c0_45 = arith.constant 0 : index
    %158 = vector.load %arg6[%157, %c0_44, %c0_45] : memref<8x8x128xf32, #tpu.memory_space<vmem>>, vector<1x8x128xf32>
    %159 = vector.shape_cast %158 : vector<1x8x128xf32> to vector<8x128xf32>
    %160 = vector.shape_cast %156 : vector<8x128xf32> to vector<1x8x128xf32>
    tpu.vector_store %arg6[%157, %c0_44, %c0_45], %160 {strides = array<i32>} : memref<8x8x128xf32, #tpu.memory_space<vmem>>, vector<1x8x128xf32>,
    %c4_i32 = arith.constant 4 : i32
    %161 = arith.index_cast %c4_i32 : i32 to index
    %c0_46 = arith.constant 0 : index
    %c0_47 = arith.constant 0 : index
    %162 = vector.load %arg2[%161, %c0_46, %c0_47] : memref<8x8x128xf32, #tpu.memory_space<vmem>>, vector<1x8x128xf32>
    %163 = vector.shape_cast %162 : vector<1x8x128xf32> to vector<8x128xf32>
    %164 = arith.truncf %143 : vector<8x32xf32> to vector<8x32xbf16>
    %cst_48 = arith.constant dense<0.000000e+00> : vector<8x128xf32>
    %165 = tpu.matmul %164, %4, %cst_48 {dimension_numbers = #tpu.dot_dimension_numbers<[1], [0], [0], [1], [0, 0, 1, 1], [], []>} : vector<8x32xbf16>, vector<32x128xbf16>, vector<8x128xf32> -> vector<8x128xf32>
    %166 = arith.addf %163, %165 : vector<8x128xf32>
    %167 = arith.negf %166 : vector<8x128xf32>
    %168 = math.exp %167 : vector<8x128xf32>
    %cst_49 = arith.constant 1.000000e+00 : f32
    %169 = vector.broadcast %cst_49 : f32 to vector<8x128xf32>
    %170 = arith.addf %169, %168 : vector<8x128xf32>
    %171 = arith.divf %169, %170 : vector<8x128xf32>
    %172 = math.tanh %166 : vector<8x128xf32>
    %173 = vector.extract_strided_slice %171 {offsets = [0, 0], sizes = [8, 32], strides = [1, 1]} : vector<8x128xf32> to vector<8x32xf32>
    %174 = vector.extract_strided_slice %171 {offsets = [0, 32], sizes = [8, 32], strides = [1, 1]} : vector<8x128xf32> to vector<8x32xf32>
    %175 = vector.extract_strided_slice %171 {offsets = [0, 96], sizes = [8, 32], strides = [1, 1]} : vector<8x128xf32> to vector<8x32xf32>
    %176 = vector.extract_strided_slice %172 {offsets = [0, 64], sizes = [8, 32], strides = [1, 1]} : vector<8x128xf32> to vector<8x32xf32>
    %177 = arith.mulf %174, %141 : vector<8x32xf32>
    %178 = arith.mulf %173, %176 : vector<8x32xf32>
    %179 = arith.addf %177, %178 : vector<8x32xf32>
    %180 = math.tanh %179 : vector<8x32xf32>
    %181 = arith.mulf %175, %180 : vector<8x32xf32>
    %cst_50 = arith.constant dense<0.000000e+00> : vector<8x128xf32>
    %182 = tpu.matmul %181, %5, %cst_50 {dimension_numbers = #tpu.dot_dimension_numbers<[1], [0], [0], [1], [0, 0, 1, 1], [], []>} : vector<8x32xf32>, vector<32x128xf32>, vector<8x128xf32> -> vector<8x128xf32>
    %183 = vector.broadcast %6 : vector<1x128xf32> to vector<8x128xf32>
    %184 = arith.addf %182, %183 : vector<8x128xf32>
    %cst_51 = arith.constant dense<0xFF800000> : vector<8xf32>
    %185 = vector.multi_reduction <maximumf>, %184, %cst_51 [1] : vector<8x128xf32> to vector<8xf32>
    %186 = vector.shape_cast %185 : vector<8xf32> to vector<8x1xf32>
    %187 = vector.broadcast %186 : vector<8x1xf32> to vector<8x128xf32>
    %188 = arith.subf %184, %187 : vector<8x128xf32>
    %189 = math.exp %188 : vector<8x128xf32>
    %cst_52 = arith.constant dense<0.000000e+00> : vector<8xf32>
    %190 = vector.multi_reduction <add>, %189, %cst_52 [1] : vector<8x128xf32> to vector<8xf32>
    %191 = vector.shape_cast %190 : vector<8xf32> to vector<8x1xf32>
    %192 = math.log %191 : vector<8x1xf32>
    %193 = vector.broadcast %192 : vector<8x1xf32> to vector<8x128xf32>
    %194 = arith.subf %188, %193 : vector<8x128xf32>
    %195 = arith.index_cast %c4_i32 : i32 to index
    %c0_53 = arith.constant 0 : index
    %c0_54 = arith.constant 0 : index
    %196 = vector.load %arg6[%195, %c0_53, %c0_54] : memref<8x8x128xf32, #tpu.memory_space<vmem>>, vector<1x8x128xf32>
    %197 = vector.shape_cast %196 : vector<1x8x128xf32> to vector<8x128xf32>
    %198 = vector.shape_cast %194 : vector<8x128xf32> to vector<1x8x128xf32>
    tpu.vector_store %arg6[%195, %c0_53, %c0_54], %198 {strides = array<i32>} : memref<8x8x128xf32, #tpu.memory_space<vmem>>, vector<1x8x128xf32>,
    %c5_i32 = arith.constant 5 : i32
    %199 = arith.index_cast %c5_i32 : i32 to index
    %c0_55 = arith.constant 0 : index
    %c0_56 = arith.constant 0 : index
    %200 = vector.load %arg2[%199, %c0_55, %c0_56] : memref<8x8x128xf32, #tpu.memory_space<vmem>>, vector<1x8x128xf32>
    %201 = vector.shape_cast %200 : vector<1x8x128xf32> to vector<8x128xf32>
    %202 = arith.truncf %181 : vector<8x32xf32> to vector<8x32xbf16>
    %cst_57 = arith.constant dense<0.000000e+00> : vector<8x128xf32>
    %203 = tpu.matmul %202, %4, %cst_57 {dimension_numbers = #tpu.dot_dimension_numbers<[1], [0], [0], [1], [0, 0, 1, 1], [], []>} : vector<8x32xbf16>, vector<32x128xbf16>, vector<8x128xf32> -> vector<8x128xf32>
    %204 = arith.addf %201, %203 : vector<8x128xf32>
    %205 = arith.negf %204 : vector<8x128xf32>
    %206 = math.exp %205 : vector<8x128xf32>
    %cst_58 = arith.constant 1.000000e+00 : f32
    %207 = vector.broadcast %cst_58 : f32 to vector<8x128xf32>
    %208 = arith.addf %207, %206 : vector<8x128xf32>
    %209 = arith.divf %207, %208 : vector<8x128xf32>
    %210 = math.tanh %204 : vector<8x128xf32>
    %211 = vector.extract_strided_slice %209 {offsets = [0, 0], sizes = [8, 32], strides = [1, 1]} : vector<8x128xf32> to vector<8x32xf32>
    %212 = vector.extract_strided_slice %209 {offsets = [0, 32], sizes = [8, 32], strides = [1, 1]} : vector<8x128xf32> to vector<8x32xf32>
    %213 = vector.extract_strided_slice %209 {offsets = [0, 96], sizes = [8, 32], strides = [1, 1]} : vector<8x128xf32> to vector<8x32xf32>
    %214 = vector.extract_strided_slice %210 {offsets = [0, 64], sizes = [8, 32], strides = [1, 1]} : vector<8x128xf32> to vector<8x32xf32>
    %215 = arith.mulf %212, %179 : vector<8x32xf32>
    %216 = arith.mulf %211, %214 : vector<8x32xf32>
    %217 = arith.addf %215, %216 : vector<8x32xf32>
    %218 = math.tanh %217 : vector<8x32xf32>
    %219 = arith.mulf %213, %218 : vector<8x32xf32>
    %cst_59 = arith.constant dense<0.000000e+00> : vector<8x128xf32>
    %220 = tpu.matmul %219, %5, %cst_59 {dimension_numbers = #tpu.dot_dimension_numbers<[1], [0], [0], [1], [0, 0, 1, 1], [], []>} : vector<8x32xf32>, vector<32x128xf32>, vector<8x128xf32> -> vector<8x128xf32>
    %221 = vector.broadcast %6 : vector<1x128xf32> to vector<8x128xf32>
    %222 = arith.addf %220, %221 : vector<8x128xf32>
    %cst_60 = arith.constant dense<0xFF800000> : vector<8xf32>
    %223 = vector.multi_reduction <maximumf>, %222, %cst_60 [1] : vector<8x128xf32> to vector<8xf32>
    %224 = vector.shape_cast %223 : vector<8xf32> to vector<8x1xf32>
    %225 = vector.broadcast %224 : vector<8x1xf32> to vector<8x128xf32>
    %226 = arith.subf %222, %225 : vector<8x128xf32>
    %227 = math.exp %226 : vector<8x128xf32>
    %cst_61 = arith.constant dense<0.000000e+00> : vector<8xf32>
    %228 = vector.multi_reduction <add>, %227, %cst_61 [1] : vector<8x128xf32> to vector<8xf32>
    %229 = vector.shape_cast %228 : vector<8xf32> to vector<8x1xf32>
    %230 = math.log %229 : vector<8x1xf32>
    %231 = vector.broadcast %230 : vector<8x1xf32> to vector<8x128xf32>
    %232 = arith.subf %226, %231 : vector<8x128xf32>
    %233 = arith.index_cast %c5_i32 : i32 to index
    %c0_62 = arith.constant 0 : index
    %c0_63 = arith.constant 0 : index
    %234 = vector.load %arg6[%233, %c0_62, %c0_63] : memref<8x8x128xf32, #tpu.memory_space<vmem>>, vector<1x8x128xf32>
    %235 = vector.shape_cast %234 : vector<1x8x128xf32> to vector<8x128xf32>
    %236 = vector.shape_cast %232 : vector<8x128xf32> to vector<1x8x128xf32>
    tpu.vector_store %arg6[%233, %c0_62, %c0_63], %236 {strides = array<i32>} : memref<8x8x128xf32, #tpu.memory_space<vmem>>, vector<1x8x128xf32>,
    %c6_i32 = arith.constant 6 : i32
    %237 = arith.index_cast %c6_i32 : i32 to index
    %c0_64 = arith.constant 0 : index
    %c0_65 = arith.constant 0 : index
    %238 = vector.load %arg2[%237, %c0_64, %c0_65] : memref<8x8x128xf32, #tpu.memory_space<vmem>>, vector<1x8x128xf32>
    %239 = vector.shape_cast %238 : vector<1x8x128xf32> to vector<8x128xf32>
    %240 = arith.truncf %219 : vector<8x32xf32> to vector<8x32xbf16>
    %cst_66 = arith.constant dense<0.000000e+00> : vector<8x128xf32>
    %241 = tpu.matmul %240, %4, %cst_66 {dimension_numbers = #tpu.dot_dimension_numbers<[1], [0], [0], [1], [0, 0, 1, 1], [], []>} : vector<8x32xbf16>, vector<32x128xbf16>, vector<8x128xf32> -> vector<8x128xf32>
    %242 = arith.addf %239, %241 : vector<8x128xf32>
    %243 = arith.negf %242 : vector<8x128xf32>
    %244 = math.exp %243 : vector<8x128xf32>
    %cst_67 = arith.constant 1.000000e+00 : f32
    %245 = vector.broadcast %cst_67 : f32 to vector<8x128xf32>
    %246 = arith.addf %245, %244 : vector<8x128xf32>
    %247 = arith.divf %245, %246 : vector<8x128xf32>
    %248 = math.tanh %242 : vector<8x128xf32>
    %249 = vector.extract_strided_slice %247 {offsets = [0, 0], sizes = [8, 32], strides = [1, 1]} : vector<8x128xf32> to vector<8x32xf32>
    %250 = vector.extract_strided_slice %247 {offsets = [0, 32], sizes = [8, 32], strides = [1, 1]} : vector<8x128xf32> to vector<8x32xf32>
    %251 = vector.extract_strided_slice %247 {offsets = [0, 96], sizes = [8, 32], strides = [1, 1]} : vector<8x128xf32> to vector<8x32xf32>
    %252 = vector.extract_strided_slice %248 {offsets = [0, 64], sizes = [8, 32], strides = [1, 1]} : vector<8x128xf32> to vector<8x32xf32>
    %253 = arith.mulf %250, %217 : vector<8x32xf32>
    %254 = arith.mulf %249, %252 : vector<8x32xf32>
    %255 = arith.addf %253, %254 : vector<8x32xf32>
    %256 = math.tanh %255 : vector<8x32xf32>
    %257 = arith.mulf %251, %256 : vector<8x32xf32>
    %cst_68 = arith.constant dense<0.000000e+00> : vector<8x128xf32>
    %258 = tpu.matmul %257, %5, %cst_68 {dimension_numbers = #tpu.dot_dimension_numbers<[1], [0], [0], [1], [0, 0, 1, 1], [], []>} : vector<8x32xf32>, vector<32x128xf32>, vector<8x128xf32> -> vector<8x128xf32>
    %259 = vector.broadcast %6 : vector<1x128xf32> to vector<8x128xf32>
    %260 = arith.addf %258, %259 : vector<8x128xf32>
    %cst_69 = arith.constant dense<0xFF800000> : vector<8xf32>
    %261 = vector.multi_reduction <maximumf>, %260, %cst_69 [1] : vector<8x128xf32> to vector<8xf32>
    %262 = vector.shape_cast %261 : vector<8xf32> to vector<8x1xf32>
    %263 = vector.broadcast %262 : vector<8x1xf32> to vector<8x128xf32>
    %264 = arith.subf %260, %263 : vector<8x128xf32>
    %265 = math.exp %264 : vector<8x128xf32>
    %cst_70 = arith.constant dense<0.000000e+00> : vector<8xf32>
    %266 = vector.multi_reduction <add>, %265, %cst_70 [1] : vector<8x128xf32> to vector<8xf32>
    %267 = vector.shape_cast %266 : vector<8xf32> to vector<8x1xf32>
    %268 = math.log %267 : vector<8x1xf32>
    %269 = vector.broadcast %268 : vector<8x1xf32> to vector<8x128xf32>
    %270 = arith.subf %264, %269 : vector<8x128xf32>
    %271 = arith.index_cast %c6_i32 : i32 to index
    %c0_71 = arith.constant 0 : index
    %c0_72 = arith.constant 0 : index
    %272 = vector.load %arg6[%271, %c0_71, %c0_72] : memref<8x8x128xf32, #tpu.memory_space<vmem>>, vector<1x8x128xf32>
    %273 = vector.shape_cast %272 : vector<1x8x128xf32> to vector<8x128xf32>
    %274 = vector.shape_cast %270 : vector<8x128xf32> to vector<1x8x128xf32>
    tpu.vector_store %arg6[%271, %c0_71, %c0_72], %274 {strides = array<i32>} : memref<8x8x128xf32, #tpu.memory_space<vmem>>, vector<1x8x128xf32>,
    %c7_i32 = arith.constant 7 : i32
    %275 = arith.index_cast %c7_i32 : i32 to index
    %c0_73 = arith.constant 0 : index
    %c0_74 = arith.constant 0 : index
    %276 = vector.load %arg2[%275, %c0_73, %c0_74] : memref<8x8x128xf32, #tpu.memory_space<vmem>>, vector<1x8x128xf32>
    %277 = vector.shape_cast %276 : vector<1x8x128xf32> to vector<8x128xf32>
    %278 = arith.truncf %257 : vector<8x32xf32> to vector<8x32xbf16>
    %cst_75 = arith.constant dense<0.000000e+00> : vector<8x128xf32>
    %279 = tpu.matmul %278, %4, %cst_75 {dimension_numbers = #tpu.dot_dimension_numbers<[1], [0], [0], [1], [0, 0, 1, 1], [], []>} : vector<8x32xbf16>, vector<32x128xbf16>, vector<8x128xf32> -> vector<8x128xf32>
    %280 = arith.addf %277, %279 : vector<8x128xf32>
    %281 = arith.negf %280 : vector<8x128xf32>
    %282 = math.exp %281 : vector<8x128xf32>
    %cst_76 = arith.constant 1.000000e+00 : f32
    %283 = vector.broadcast %cst_76 : f32 to vector<8x128xf32>
    %284 = arith.addf %283, %282 : vector<8x128xf32>
    %285 = arith.divf %283, %284 : vector<8x128xf32>
    %286 = math.tanh %280 : vector<8x128xf32>
    %287 = vector.extract_strided_slice %285 {offsets = [0, 0], sizes = [8, 32], strides = [1, 1]} : vector<8x128xf32> to vector<8x32xf32>
    %288 = vector.extract_strided_slice %285 {offsets = [0, 32], sizes = [8, 32], strides = [1, 1]} : vector<8x128xf32> to vector<8x32xf32>
    %289 = vector.extract_strided_slice %285 {offsets = [0, 96], sizes = [8, 32], strides = [1, 1]} : vector<8x128xf32> to vector<8x32xf32>
    %290 = vector.extract_strided_slice %286 {offsets = [0, 64], sizes = [8, 32], strides = [1, 1]} : vector<8x128xf32> to vector<8x32xf32>
    %291 = arith.mulf %288, %255 : vector<8x32xf32>
    %292 = arith.mulf %287, %290 : vector<8x32xf32>
    %293 = arith.addf %291, %292 : vector<8x32xf32>
    %294 = math.tanh %293 : vector<8x32xf32>
    %295 = arith.mulf %289, %294 : vector<8x32xf32>
    %cst_77 = arith.constant dense<0.000000e+00> : vector<8x128xf32>
    %296 = tpu.matmul %295, %5, %cst_77 {dimension_numbers = #tpu.dot_dimension_numbers<[1], [0], [0], [1], [0, 0, 1, 1], [], []>} : vector<8x32xf32>, vector<32x128xf32>, vector<8x128xf32> -> vector<8x128xf32>
    %297 = vector.broadcast %6 : vector<1x128xf32> to vector<8x128xf32>
    %298 = arith.addf %296, %297 : vector<8x128xf32>
    %cst_78 = arith.constant dense<0xFF800000> : vector<8xf32>
    %299 = vector.multi_reduction <maximumf>, %298, %cst_78 [1] : vector<8x128xf32> to vector<8xf32>
    %300 = vector.shape_cast %299 : vector<8xf32> to vector<8x1xf32>
    %301 = vector.broadcast %300 : vector<8x1xf32> to vector<8x128xf32>
    %302 = arith.subf %298, %301 : vector<8x128xf32>
    %303 = math.exp %302 : vector<8x128xf32>
    %cst_79 = arith.constant dense<0.000000e+00> : vector<8xf32>
    %304 = vector.multi_reduction <add>, %303, %cst_79 [1] : vector<8x128xf32> to vector<8xf32>
    %305 = vector.shape_cast %304 : vector<8xf32> to vector<8x1xf32>
    %306 = math.log %305 : vector<8x1xf32>
    %307 = vector.broadcast %306 : vector<8x1xf32> to vector<8x128xf32>
    %308 = arith.subf %302, %307 : vector<8x128xf32>
    %309 = arith.index_cast %c7_i32 : i32 to index
    %c0_80 = arith.constant 0 : index
    %c0_81 = arith.constant 0 : index
    %310 = vector.load %arg6[%309, %c0_80, %c0_81] : memref<8x8x128xf32, #tpu.memory_space<vmem>>, vector<1x8x128xf32>
    %311 = vector.shape_cast %310 : vector<1x8x128xf32> to vector<8x128xf32>
    %312 = vector.shape_cast %308 : vector<8x128xf32> to vector<1x8x128xf32>
    tpu.vector_store %arg6[%309, %c0_80, %c0_81], %312 {strides = array<i32>} : memref<8x8x128xf32, #tpu.memory_space<vmem>>, vector<1x8x128xf32>,
    %c8_i32 = arith.constant 8 : i32
    %c0_82 = arith.constant 0 : index
    %c0_83 = arith.constant 0 : index
    %313 = vector.load %arg7[%c0_82, %c0_83] : memref<8x32xf32, #tpu.memory_space<vmem>>, vector<8x32xf32>
    tpu.vector_store %arg7[%c0_82, %c0_83], %295 {strides = array<i32>} : memref<8x32xf32, #tpu.memory_space<vmem>>, vector<8x32xf32>,
    %c0_84 = arith.constant 0 : index
    %c0_85 = arith.constant 0 : index
    %314 = vector.load %arg8[%c0_84, %c0_85] : memref<8x32xf32, #tpu.memory_space<vmem>>, vector<8x32xf32>
    tpu.vector_store %arg8[%c0_84, %c0_85], %293 {strides = array<i32>} : memref<8x32xf32, #tpu.memory_space<vmem>>, vector<8x32xf32>,
    return
  }
  func.func @transform_0(%arg0: i32, %arg1: i32) -> (i32, i32, i32) {
    %c0_i32 = arith.constant 0 : i32
    %c0_i32_0 = arith.constant 0 : i32
    return %arg1, %arg0, %c0_i32 : i32, i32, i32
  }
  func.func @transform_1(%arg0: i32, %arg1: i32) -> (i32, i32) {
    %c0_i32 = arith.constant 0 : i32
    %c0_i32_0 = arith.constant 0 : i32
    %c0_i32_1 = arith.constant 0 : i32
    return %c0_i32, %c0_i32_0 : i32, i32
  }
  func.func @transform_2(%arg0: i32, %arg1: i32) -> (i32, i32) {
    %c0_i32 = arith.constant 0 : i32
    %c0_i32_0 = arith.constant 0 : i32
    %c0_i32_1 = arith.constant 0 : i32
    return %c0_i32, %c0_i32_0 : i32, i32
  }
  func.func @transform_3(%arg0: i32, %arg1: i32) -> (i32, i32) {
    %c0_i32 = arith.constant 0 : i32
    %c0_i32_0 = arith.constant 0 : i32
    %c0_i32_1 = arith.constant 0 : i32
    return %c0_i32, %c0_i32_0 : i32, i32
  }
  func.func @transform_4(%arg0: i32, %arg1: i32) -> (i32, i32, i32) {
    %c0_i32 = arith.constant 0 : i32
    %c0_i32_0 = arith.constant 0 : i32
    return %arg1, %arg0, %c0_i32 : i32, i32, i32
  }
}

</mosaic_0001>

<llo_original>
// kernel: tpu_custom_call.1
$region0: #{tpu_custom_call.1}
  #allocation0 [shape = 'u32[]', space=smem, size = 0x4, offset = 0x4, fixed_abs, tag = 'smem constant byte address 0x4 - core index']
  #allocation1 [shape = 'u32[144,128]{1,0:T(1,128)}', space=vmem, size = 0x12000, scoped, tag = 'internal scratch']
  #allocation2 [shape = 'f32[8,32]{1,0:T(8,128)}', space=vmem, size = 0x1000, scoped, tag = 'scratch operand']
  #allocation3 [shape = 'f32[8,32]{1,0:T(8,128)}', space=vmem, size = 0x1000, scoped, tag = 'scratch operand']
  %s0 = inlined_call_operand.hbm [shape: f32[8,8,128], index: 0, kind: input, shape index: {}]
  %s1 = inlined_call_operand.hbm [shape: f32[32,128], index: 1, kind: input, shape index: {}]
  %s2 = inlined_call_operand.hbm [shape: f32[32,128], index: 2, kind: input, shape index: {}]
  %s3 = inlined_call_operand.vmem [shape: f32[1,128], index: 3, kind: input, shape index: {}]
  %s4 = inlined_call_operand.hbm [shape: f32[8,8,128], index: 4, kind: output, shape index: {}]
  %s5 = sld [smem:[#allocation0]]
  $region42: #{tpu_custom_call.1} parent=0
    _
  %s7 = ssub.s32 1, %s5
  %s8 = scalar_select 0, %s7, %s5
  $region1: #{tpu_custom_call.1} parent=0
    #allocation4 [shape = 'u8[32768]{0}', space=vmem, size = 0x8000, scoped, tag = 'input window, operand 0, single buffered']
    #allocation5 [shape = 's32[1]{0}', space=sflag, size = 0x4, scoped, tag = 'scoped memory for tpu_custom_call.1']
    #allocation6 [shape = 's32[1]{0}', space=sflag, size = 0x4, scoped, tag = 'scoped memory for tpu_custom_call.1']
    #allocation7 [shape = 'u8[16384]{0}', space=vmem, size = 0x4000, scoped, tag = 'input window, operand 1, single buffered']
    #allocation8 [shape = 's32[1]{0}', space=sflag, size = 0x4, scoped, tag = 'scoped memory for tpu_custom_call.1']
    #allocation9 [shape = 'u8[16384]{0}', space=vmem, size = 0x4000, scoped, tag = 'input window, operand 2, single buffered']
    #allocation10 [shape = 'u8[32768]{0}', space=vmem, size = 0x8000, scoped, tag = 'output window, operand 0, single buffered']
    %9 = vsyncpa [#allocation5], 0
    %10 = vsyncpa [#allocation8], 0
    %11 = vsyncpa [#allocation6], 0
    // Predicated region
    $region2: #{tpu_custom_call.1} parent=1 // pred_check
      _
    $region3: #{tpu_custom_call.1} parent=1 // pred_check_branch
      %13 = sbr.rel (0) target = $region5
    $region4: #{tpu_custom_call.1} parent=1 // pred_region
      %s15 = ssub.s32 1024, 1024
      %16 = vsyncadd [#allocation5], %s15
      %s17 = sshll.u32 [#allocation4], 4
      %s18 = int_to_ptr.vmem [resolvable:$true] %s17
      %23 = dma.hbm_to_vmem [thread:$0]  %s0, 1024, %s18, [#allocation5], 128, 128, 8
    $region5: #{tpu_custom_call.1} parent=1 // pred_fallthru
      _
    // Predicated region
    $region6: #{tpu_custom_call.1} parent=1 // pred_check
      _
    $region7: #{tpu_custom_call.1} parent=1 // pred_check_branch
      %25 = sbr.rel (0) target = $region9
    $region8: #{tpu_custom_call.1} parent=1 // pred_region
      %s27 = ssub.s32 512, 512
      %28 = vsyncadd [#allocation8], %s27
      %s29 = sshll.u32 [#allocation7], 4
      %s30 = int_to_ptr.vmem [resolvable:$true] %s29
      %35 = dma.hbm_to_vmem [thread:$0]  %s1, 512, %s30, [#allocation8], 128, 128, 8
    $region9: #{tpu_custom_call.1} parent=1 // pred_fallthru
      _
    // Predicated region
    $region10: #{tpu_custom_call.1} parent=1 // pred_check
      _
    $region11: #{tpu_custom_call.1} parent=1 // pred_check_branch
      %37 = sbr.rel (0) target = $region13
    $region12: #{tpu_custom_call.1} parent=1 // pred_region
      %s39 = ssub.s32 512, 512
      %40 = vsyncadd [#allocation8], %s39
      %s41 = sshll.u32 [#allocation9], 4
      %s42 = int_to_ptr.vmem [resolvable:$true] %s41
      %47 = dma.hbm_to_vmem [thread:$0]  %s2, 512, %s42, [#allocation8], 128, 128, 8
    $region13: #{tpu_custom_call.1} parent=1 // pred_fallthru
      _
    // Predicated region
    $region14: #{tpu_custom_call.1} parent=1 // pred_check
      _
    $region15: #{tpu_custom_call.1} parent=1 // pred_check_branch
      %49 = sbr.rel (0) target = $region17
    $region16: #{tpu_custom_call.1} parent=1 // pred_region
      _
    $region17: #{tpu_custom_call.1} parent=1 // pred_fallthru
      _
    // Predicated region
    $region18: #{tpu_custom_call.1} parent=1 // pred_check
      _
    $region19: #{tpu_custom_call.1} parent=1 // pred_check_branch
      %51 = sbr.rel (0) target = $region21
    $region20: #{tpu_custom_call.1} parent=1 // pred_region
      %52 = dma.done [#allocation5], 1024
    $region21: #{tpu_custom_call.1} parent=1 // pred_fallthru
      _
    // Predicated region
    $region22: #{tpu_custom_call.1} parent=1 // pred_check
      _
    $region23: #{tpu_custom_call.1} parent=1 // pred_check_branch
      %54 = sbr.rel (0) target = $region25
    $region24: #{tpu_custom_call.1} parent=1 // pred_region
      %55 = dma.done [#allocation8], 512
    $region25: #{tpu_custom_call.1} parent=1 // pred_fallthru
      _
    // Predicated region
    $region26: #{tpu_custom_call.1} parent=1 // pred_check
      _
    $region27: #{tpu_custom_call.1} parent=1 // pred_check_branch
      %57 = sbr.rel (0) target = $region29
    $region28: #{tpu_custom_call.1} parent=1 // pred_region
      %58 = dma.done [#allocation8], 512
    $region29: #{tpu_custom_call.1} parent=1 // pred_fallthru
      _
    %p60 = scmp.eq.s32.totalorder 0, 0
    // Predicated region
    $region30: #{tpu_custom_call.1} parent=1 // pred_check
      %p61 = pneg %p60
    $region31: #{tpu_custom_call.1} parent=1 // pred_check_branch
      %63 = sbr.rel (%p61) target = $region33
    $region32: #{tpu_custom_call.1} parent=1 // pred_region
      %vm64 = vcmask 261120
      %65 = vst.msk [vmem:[#allocation2] sm:$0xff] %vm64, 0.0
      %66 = vst.msk [vmem:[#allocation3] sm:$0xff] %vm64, 0.0
    $region33: #{tpu_custom_call.1} parent=1 // pred_fallthru
      _
    %v67 = vld [vmem:[#allocation7] sm:$0xff]
    %v68 = vld [vmem:[#allocation7 + $0x8] sm:$0xff]
    %v69 = vld [vmem:[#allocation7 + $0x10] sm:$0xff]
    %v70 = vld [vmem:[#allocation7 + $0x18] sm:$0xff]
    %v71 = vpack.c.bf16 %v68, %v67
    %v72 = vpack.c.bf16 %v70, %v69
    %v73 = vld [vmem:[#allocation9] sm:$0xff]
    %v74 = vld [vmem:[#allocation9 + $0x8] sm:$0xff]
    %v75 = vld [vmem:[#allocation9 + $0x10] sm:$0xff]
    %v76 = vld [vmem:[#allocation9 + $0x18] sm:$0xff]
    %v77 = vld [vmem:[%s3] sm:$0x1]
    %v78 = vld [vmem:[#allocation2] sm:$0xff]
    %v79 = vld [vmem:[#allocation3] sm:$0xff]
    %v80 = vld [vmem:[#allocation4] sm:$0xff]
    %v81 = vpack.c.bf16 %v78, %v78
    %vm82 = vcmask 261120
    %v84 = vsel %vm82, %v81, 0
    %86 = vmatprep.subr.bf16.mxu0 0
    %87 = vmatpush1.bf16.msra.mxu0 0
    %88 = vmatprep.subr.bf16.mxu0 0
    %89 = vmatpush1.bf16.msra.mxu0 0
    %90 = vmatprep.subr.bf16.mxu0 0
    %91 = vmatpush1.bf16.msra.mxu0 0
    %92 = vmatprep.subr.bf16.mxu0 0
    %93 = vmatpush1.bf16.msra.mxu0 0
    %94 = vmatprep.subr.bf16.mxu0 0
    %95 = vmatpush1.bf16.msra.mxu0 0
    %96 = vmatprep.subr.bf16.mxu0 0
    %97 = vmatpush1.bf16.msra.mxu0 0
    %98 = vmatprep.subr.bf16.mxu0 0
    %99 = vmatpush1.bf16.msra.mxu0 %v72
    %100 = vmatprep.subr.bf16.mxu0 0
    %101 = vmatpush1.bf16.msra.mxu0 %v71
    %102 = vmatprep.subr.bf16.mxu0 0
    %103 = vmatpush2.bf16.msra.mxu0 0
    %104 = vmatprep.subr.bf16.mxu0 0
    %105 = vmatpush2.bf16.msra.mxu0 0
    %106 = vmatprep.subr.bf16.mxu0 0
    %107 = vmatpush2.bf16.msra.mxu0 0
    %108 = vmatprep.subr.bf16.mxu0 0
    %109 = vmatpush2.bf16.msra.mxu0 0
    %110 = vmatprep.subr.bf16.mxu0 0
    %111 = vmatpush2.bf16.msra.mxu0 0
    %112 = vmatprep.subr.bf16.mxu0 0
    %113 = vmatpush2.bf16.msra.mxu0 0
    %114 = vmatprep.subr.bf16.mxu0 0
    %115 = vmatpush2.bf16.msra.mxu0 0
    %116 = vmatprep.subr.bf16.mxu0 0
    %117 = vmatpush2.bf16.msra.mxu0 0
    %118 = vmatprep.mubr.bf16.mxu0 0
    %119 = vmatmul.mubr.bf16.gmra.mxu0 %v84
    %v120 = vpop.f32.mrf.mxu0
    %v121 = vadd.f32 0.0, %v120
    %v122 = vpop.f32.mrf.mxu0
    %v123 = vpop.f32.mrf.mxu0
    %v124 = vpop.f32.mrf.mxu0
    %125 = vdwg.mxu0
    %v126 = vadd.f32 %v80, %v121
    %v127 = vxor.u32 %v126, 2147483648
    %v128 = vmul.f32 %v127, 1.442695
    %v129 = vpow.pop %v128
    %v130 = vadd.f32 %v129, 1.0
    %v131 = vrcp.pop %v130
    %v132 = vmul.f32 1.0, %v131
    %v133 = vtanh.pop %v126
    %135 = vrot.lane.b32.xlu0 %v79, 32
    %v136 = vpop.permute.xlu0 %135
    %v138 = vmul.f32 %v132, %v136
    %140 = vrot.lane.b32.xlu0 %v133, 64
    %v141 = vpop.permute.xlu0 %140
    %v143 = vmul.f32 %v132, %v141
    %145 = vrot.lane.b32.xlu0 %v143, 32
    %v146 = vpop.permute.xlu0 %145
    %v148 = vadd.f32 %v138, %v146
    %v149 = vtanh.pop %v148
    %151 = vrot.lane.b32.xlu0 %v149, 64
    %v152 = vpop.permute.xlu0 %151
    %v154 = vmul.f32 %v132, %v152
    %v156 = vlaneseq
    %v157 = vshrl.u32 %v156, 7
    %v158 = vsub.s32 0, %v157
    %v159 = vrot.slane %v77, %v158
    %162 = vrot.lane.b32.xlu0 %v154, 32
    %v163 = vpop.permute.xlu0 %162
    %v164 = vsel %vm82, %v163, 0
    %166 = vmatprep.subr.mxu0 0.0
    %167 = vmatpush1.msra.mxu0 0.0
    %168 = vmatprep.subr.mxu0 0.0
    %169 = vmatpush1.msra.mxu0 0.0
    %170 = vmatprep.subr.mxu0 0.0
    %171 = vmatpush1.msra.mxu0 0.0
    %172 = vmatprep.subr.mxu0 0.0
    %173 = vmatpush1.msra.mxu0 0.0
    %174 = vmatprep.subr.mxu0 0.0
    %175 = vmatpush1.msra.mxu0 0.0
    %176 = vmatprep.subr.mxu0 0.0
    %177 = vmatpush1.msra.mxu0 0.0
    %178 = vmatprep.subr.mxu0 0.0
    %179 = vmatpush1.msra.mxu0 0.0
    %180 = vmatprep.subr.mxu0 0.0
    %181 = vmatpush1.msra.mxu0 0.0
    %182 = vmatprep.subr.mxu0 0.0
    %183 = vmatpush1.msra.mxu0 0.0
    %184 = vmatprep.subr.mxu0 0.0
    %185 = vmatpush1.msra.mxu0 0.0
    %186 = vmatprep.subr.mxu0 0.0
    %187 = vmatpush1.msra.mxu0 0.0
    %188 = vmatprep.subr.mxu0 0.0
    %189 = vmatpush1.msra.mxu0 0.0
    %190 = vmatprep.subr.mxu0 0.0
    %191 = vmatpush1.msra.mxu0 %v76
    %192 = vmatprep.subr.mxu0 0.0
    %193 = vmatpush1.msra.mxu0 %v75
    %194 = vmatprep.subr.mxu0 0.0
    %195 = vmatpush1.msra.mxu0 %v74
    %196 = vmatprep.subr.mxu0 0.0
    %197 = vmatpush1.msra.mxu0 %v73
    %198 = vmatprep.subr.mxu0 0.0
    %199 = vmatpush2.msra.mxu0 0.0
    %200 = vmatprep.subr.mxu0 0.0
    %201 = vmatpush2.msra.mxu0 0.0
    %202 = vmatprep.subr.mxu0 0.0
    %203 = vmatpush2.msra.mxu0 0.0
    %204 = vmatprep.subr.mxu0 0.0
    %205 = vmatpush2.msra.mxu0 0.0
    %206 = vmatprep.subr.mxu0 0.0
    %207 = vmatpush2.msra.mxu0 0.0
    %208 = vmatprep.subr.mxu0 0.0
    %209 = vmatpush2.msra.mxu0 0.0
    %210 = vmatprep.subr.mxu0 0.0
    %211 = vmatpush2.msra.mxu0 0.0
    %212 = vmatprep.subr.mxu0 0.0
    %213 = vmatpush2.msra.mxu0 0.0
    %214 = vmatprep.subr.mxu0 0.0
    %215 = vmatpush2.msra.mxu0 0.0
    %216 = vmatprep.subr.mxu0 0.0
    %217 = vmatpush2.msra.mxu0 0.0
    %218 = vmatprep.subr.mxu0 0.0
    %219 = vmatpush2.msra.mxu0 0.0
    %220 = vmatprep.subr.mxu0 0.0
    %221 = vmatpush2.msra.mxu0 0.0
    %222 = vmatprep.subr.mxu0 0.0
    %223 = vmatpush2.msra.mxu0 0.0
    %224 = vmatprep.subr.mxu0 0.0
    %225 = vmatpush2.msra.mxu0 0.0
    %226 = vmatprep.subr.mxu0 0.0
    %227 = vmatpush2.msra.mxu0 0.0
    %228 = vmatprep.subr.mxu0 0.0
    %229 = vmatpush2.msra.mxu0 0.0
    %230 = vmatprep.mubr.f32.mxu0 0.0
    %231 = vmatmul.mubr.f32.gmra.mxu0 %v164
    %v232 = vpop.f32.mrf.mxu0
    %v233 = vadd.f32 %v159, %v232
    %v234 = vpop.f32.mrf.mxu0
    %235 = vdwg.mxu0
    %236 = vmax.xlane.f32.xlu0 %v233
    %v237 = vpop.xlane.xlu0 %236
    %v238 = vsub.f32 %v233, %v237
    %v239 = vmul.f32 %v238, 1.442695
    %v240 = vpow.pop %v239
    %241 = vadd.xlane.f32.xlu0 %v240
    %v242 = vpop.xlane.xlu0 %241
    %v243 = vlog2.pop %v242
    %v244 = vmul.f32 %v243, 0.6931472
    %v245 = vsub.f32 %v238, %v244
    %246 = vst [vmem:[#allocation10] sm:$0xff] %v245
    %s247 = scalar_lea.vmem [#allocation4], 8
    %v248 = vld [vmem:[%s247] sm:$0xff]
    %v249 = vpack.c.bf16 %v154, %v154
    %251 = vrot.lane.b32.xlu0 %v249, 32
    %v252 = vpop.permute.xlu0 %251
    %v254 = vsel %vm82, %v252, 0
    %256 = vmatprep.subr.bf16.mxu0 0
    %257 = vmatpush1.bf16.msra.mxu0 0
    %258 = vmatprep.subr.bf16.mxu0 0
    %259 = vmatpush1.bf16.msra.mxu0 0
    %260 = vmatprep.subr.bf16.mxu0 0
    %261 = vmatpush1.bf16.msra.mxu0 0
    %262 = vmatprep.subr.bf16.mxu0 0
    %263 = vmatpush1.bf16.msra.mxu0 0
    %264 = vmatprep.subr.bf16.mxu0 0
    %265 = vmatpush1.bf16.msra.mxu0 0
    %266 = vmatprep.subr.bf16.mxu0 0
    %267 = vmatpush1.bf16.msra.mxu0 0
    %268 = vmatprep.subr.bf16.mxu0 0
    %269 = vmatpush1.bf16.msra.mxu0 %v72
    %270 = vmatprep.subr.bf16.mxu0 0
    %271 = vmatpush1.bf16.msra.mxu0 %v71
    %272 = vmatprep.subr.bf16.mxu0 0
    %273 = vmatpush2.bf16.msra.mxu0 0
    %274 = vmatprep.subr.bf16.mxu0 0
    %275 = vmatpush2.bf16.msra.mxu0 0
    %276 = vmatprep.subr.bf16.mxu0 0
    %277 = vmatpush2.bf16.msra.mxu0 0
    %278 = vmatprep.subr.bf16.mxu0 0
    %279 = vmatpush2.bf16.msra.mxu0 0
    %280 = vmatprep.subr.bf16.mxu0 0
    %281 = vmatpush2.bf16.msra.mxu0 0
    %282 = vmatprep.subr.bf16.mxu0 0
    %283 = vmatpush2.bf16.msra.mxu0 0
    %284 = vmatprep.subr.bf16.mxu0 0
    %285 = vmatpush2.bf16.msra.mxu0 0
    %286 = vmatprep.subr.bf16.mxu0 0
    %287 = vmatpush2.bf16.msra.mxu0 0
    %288 = vmatprep.mubr.bf16.mxu0 0
    %289 = vmatmul.mubr.bf16.gmra.mxu0 %v254
    %v290 = vpop.f32.mrf.mxu0
    %v291 = vadd.f32 0.0, %v290
    %v292 = vpop.f32.mrf.mxu0
    %v293 = vpop.f32.mrf.mxu0
    %v294 = vpop.f32.mrf.mxu0
    %295 = vdwg.mxu0
    %v296 = vadd.f32 %v248, %v291
    %v297 = vxor.u32 %v296, 2147483648
    %v298 = vmul.f32 %v297, 1.442695
    %v299 = vpow.pop %v298
    %v300 = vadd.f32 %v299, 1.0
    %v301 = vrcp.pop %v300
    %v302 = vmul.f32 1.0, %v301
    %v303 = vtanh.pop %v296
    %v304 = vmul.f32 %v302, %v148
    %306 = vrot.lane.b32.xlu0 %v303, 64
    %v307 = vpop.permute.xlu0 %306
    %v309 = vmul.f32 %v302, %v307
    %311 = vrot.lane.b32.xlu0 %v309, 32
    %v312 = vpop.permute.xlu0 %311
    %v314 = vadd.f32 %v304, %v312
    %v315 = vtanh.pop %v314
    %317 = vrot.lane.b32.xlu0 %v315, 64
    %v318 = vpop.permute.xlu0 %317
    %v320 = vmul.f32 %v302, %v318
    %322 = vrot.lane.b32.xlu0 %v320, 32
    %v323 = vpop.permute.xlu0 %322
    %v324 = vsel %vm82, %v323, 0
    %326 = vmatprep.subr.mxu0 0.0
    %327 = vmatpush1.msra.mxu0 0.0
    %328 = vmatprep.subr.mxu0 0.0
    %329 = vmatpush1.msra.mxu0 0.0
    %330 = vmatprep.subr.mxu0 0.0
    %331 = vmatpush1.msra.mxu0 0.0
    %332 = vmatprep.subr.mxu0 0.0
    %333 = vmatpush1.msra.mxu0 0.0
    %334 = vmatprep.subr.mxu0 0.0
    %335 = vmatpush1.msra.mxu0 0.0
    %336 = vmatprep.subr.mxu0 0.0
    %337 = vmatpush1.msra.mxu0 0.0
    %338 = vmatprep.subr.mxu0 0.0
    %339 = vmatpush1.msra.mxu0 0.0
    %340 = vmatprep.subr.mxu0 0.0
    %341 = vmatpush1.msra.mxu0 0.0
    %342 = vmatprep.subr.mxu0 0.0
    %343 = vmatpush1.msra.mxu0 0.0
    %344 = vmatprep.subr.mxu0 0.0
    %345 = vmatpush1.msra.mxu0 0.0
    %346 = vmatprep.subr.mxu0 0.0
    %347 = vmatpush1.msra.mxu0 0.0
    %348 = vmatprep.subr.mxu0 0.0
    %349 = vmatpush1.msra.mxu0 0.0
    %350 = vmatprep.subr.mxu0 0.0
    %351 = vmatpush1.msra.mxu0 %v76
    %352 = vmatprep.subr.mxu0 0.0
    %353 = vmatpush1.msra.mxu0 %v75
    %354 = vmatprep.subr.mxu0 0.0
    %355 = vmatpush1.msra.mxu0 %v74
    %356 = vmatprep.subr.mxu0 0.0
    %357 = vmatpush1.msra.mxu0 %v73
    %358 = vmatprep.subr.mxu0 0.0
    %359 = vmatpush2.msra.mxu0 0.0
    %360 = vmatprep.subr.mxu0 0.0
    %361 = vmatpush2.msra.mxu0 0.0
    %362 = vmatprep.subr.mxu0 0.0
    %363 = vmatpush2.msra.mxu0 0.0
    %364 = vmatprep.subr.mxu0 0.0
    %365 = vmatpush2.msra.mxu0 0.0
    %366 = vmatprep.subr.mxu0 0.0
    %367 = vmatpush2.msra.mxu0 0.0
    %368 = vmatprep.subr.mxu0 0.0
    %369 = vmatpush2.msra.mxu0 0.0
    %370 = vmatprep.subr.mxu0 0.0
    %371 = vmatpush2.msra.mxu0 0.0
    %372 = vmatprep.subr.mxu0 0.0
    %373 = vmatpush2.msra.mxu0 0.0
    %374 = vmatprep.subr.mxu0 0.0
    %375 = vmatpush2.msra.mxu0 0.0
    %376 = vmatprep.subr.mxu0 0.0
    %377 = vmatpush2.msra.mxu0 0.0
    %378 = vmatprep.subr.mxu0 0.0
    %379 = vmatpush2.msra.mxu0 0.0
    %380 = vmatprep.subr.mxu0 0.0
    %381 = vmatpush2.msra.mxu0 0.0
    %382 = vmatprep.subr.mxu0 0.0
    %383 = vmatpush2.msra.mxu0 0.0
    %384 = vmatprep.subr.mxu0 0.0
    %385 = vmatpush2.msra.mxu0 0.0
    %386 = vmatprep.subr.mxu0 0.0
    %387 = vmatpush2.msra.mxu0 0.0
    %388 = vmatprep.subr.mxu0 0.0
    %389 = vmatpush2.msra.mxu0 0.0
    %390 = vmatprep.mubr.f32.mxu0 0.0
    %391 = vmatmul.mubr.f32.gmra.mxu0 %v324
    %v392 = vpop.f32.mrf.mxu0
    %v393 = vadd.f32 %v159, %v392
    %v394 = vpop.f32.mrf.mxu0
    %395 = vdwg.mxu0
    %396 = vmax.xlane.f32.xlu0 %v393
    %v397 = vpop.xlane.xlu0 %396
    %v398 = vsub.f32 %v393, %v397
    %v399 = vmul.f32 %v398, 1.442695
    %v400 = vpow.pop %v399
    %401 = vadd.xlane.f32.xlu0 %v400
    %v402 = vpop.xlane.xlu0 %401
    %v403 = vlog2.pop %v402
    %v404 = vmul.f32 %v403, 0.6931472
    %v405 = vsub.f32 %v398, %v404
    %s406 = scalar_lea.vmem [#allocation10], 8
    %407 = vst [vmem:[%s406] sm:$0xff] %v405
    %s408 = scalar_lea.vmem [#allocation4], 16
    %v409 = vld [vmem:[%s408] sm:$0xff]
    %v410 = vpack.c.bf16 %v320, %v320
    %412 = vrot.lane.b32.xlu0 %v410, 32
    %v413 = vpop.permute.xlu0 %412
    %v415 = vsel %vm82, %v413, 0
    %417 = vmatprep.subr.bf16.mxu0 0
    %418 = vmatpush1.bf16.msra.mxu0 0
    %419 = vmatprep.subr.bf16.mxu0 0
    %420 = vmatpush1.bf16.msra.mxu0 0
    %421 = vmatprep.subr.bf16.mxu0 0
    %422 = vmatpush1.bf16.msra.mxu0 0
    %423 = vmatprep.subr.bf16.mxu0 0
    %424 = vmatpush1.bf16.msra.mxu0 0
    %425 = vmatprep.subr.bf16.mxu0 0
    %426 = vmatpush1.bf16.msra.mxu0 0
    %427 = vmatprep.subr.bf16.mxu0 0
    %428 = vmatpush1.bf16.msra.mxu0 0
    %429 = vmatprep.subr.bf16.mxu0 0
    %430 = vmatpush1.bf16.msra.mxu0 %v72
    %431 = vmatprep.subr.bf16.mxu0 0
    %432 = vmatpush1.bf16.msra.mxu0 %v71
    %433 = vmatprep.subr.bf16.mxu0 0
    %434 = vmatpush2.bf16.msra.mxu0 0
    %435 = vmatprep.subr.bf16.mxu0 0
    %436 = vmatpush2.bf16.msra.mxu0 0
    %437 = vmatprep.subr.bf16.mxu0 0
    %438 = vmatpush2.bf16.msra.mxu0 0
    %439 = vmatprep.subr.bf16.mxu0 0
    %440 = vmatpush2.bf16.msra.mxu0 0
    %441 = vmatprep.subr.bf16.mxu0 0
    %442 = vmatpush2.bf16.msra.mxu0 0
    %443 = vmatprep.subr.bf16.mxu0 0
    %444 = vmatpush2.bf16.msra.mxu0 0
    %445 = vmatprep.subr.bf16.mxu0 0
    %446 = vmatpush2.bf16.msra.mxu0 0
    %447 = vmatprep.subr.bf16.mxu0 0
    %448 = vmatpush2.bf16.msra.mxu0 0
    %449 = vmatprep.mubr.bf16.mxu0 0
    %450 = vmatmul.mubr.bf16.gmra.mxu0 %v415
    %v451 = vpop.f32.mrf.mxu0
    %v452 = vadd.f32 0.0, %v451
    %v453 = vpop.f32.mrf.mxu0
    %v454 = vpop.f32.mrf.mxu0
    %v455 = vpop.f32.mrf.mxu0
    %456 = vdwg.mxu0
    %v457 = vadd.f32 %v409, %v452
    %v458 = vxor.u32 %v457, 2147483648
    %v459 = vmul.f32 %v458, 1.442695
    %v460 = vpow.pop %v459
    %v461 = vadd.f32 %v460, 1.0
    %v462 = vrcp.pop %v461
    %v463 = vmul.f32 1.0, %v462
    %v464 = vtanh.pop %v457
    %v465 = vmul.f32 %v463, %v314
    %467 = vrot.lane.b32.xlu0 %v464, 64
    %v468 = vpop.permute.xlu0 %467
    %v470 = vmul.f32 %v463, %v468
    %472 = vrot.lane.b32.xlu0 %v470, 32
    %v473 = vpop.permute.xlu0 %472
    %v475 = vadd.f32 %v465, %v473
    %v476 = vtanh.pop %v475
    %478 = vrot.lane.b32.xlu0 %v476, 64
    %v479 = vpop.permute.xlu0 %478
    %v481 = vmul.f32 %v463, %v479
    %483 = vrot.lane.b32.xlu0 %v481, 32
    %v484 = vpop.permute.xlu0 %483
    %v485 = vsel %vm82, %v484, 0
    %487 = vmatprep.subr.mxu0 0.0
    %488 = vmatpush1.msra.mxu0 0.0
    %489 = vmatprep.subr.mxu0 0.0
    %490 = vmatpush1.msra.mxu0 0.0
    %491 = vmatprep.subr.mxu0 0.0
    %492 = vmatpush1.msra.mxu0 0.0
    %493 = vmatprep.subr.mxu0 0.0
    %494 = vmatpush1.msra.mxu0 0.0
    %495 = vmatprep.subr.mxu0 0.0
    %496 = vmatpush1.msra.mxu0 0.0
    %497 = vmatprep.subr.mxu0 0.0
    %498 = vmatpush1.msra.mxu0 0.0
    %499 = vmatprep.subr.mxu0 0.0
    %500 = vmatpush1.msra.mxu0 0.0
    %501 = vmatprep.subr.mxu0 0.0
    %502 = vmatpush1.msra.mxu0 0.0
    %503 = vmatprep.subr.mxu0 0.0
    %504 = vmatpush1.msra.mxu0 0.0
    %505 = vmatprep.subr.mxu0 0.0
    %506 = vmatpush1.msra.mxu0 0.0
    %507 = vmatprep.subr.mxu0 0.0
    %508 = vmatpush1.msra.mxu0 0.0
    %509 = vmatprep.subr.mxu0 0.0
    %510 = vmatpush1.msra.mxu0 0.0
    %511 = vmatprep.subr.mxu0 0.0
    %512 = vmatpush1.msra.mxu0 %v76
    %513 = vmatprep.subr.mxu0 0.0
    %514 = vmatpush1.msra.mxu0 %v75
    %515 = vmatprep.subr.mxu0 0.0
    %516 = vmatpush1.msra.mxu0 %v74
    %517 = vmatprep.subr.mxu0 0.0
    %518 = vmatpush1.msra.mxu0 %v73
    %519 = vmatprep.subr.mxu0 0.0
    %520 = vmatpush2.msra.mxu0 0.0
    %521 = vmatprep.subr.mxu0 0.0
    %522 = vmatpush2.msra.mxu0 0.0
    %523 = vmatprep.subr.mxu0 0.0
    %524 = vmatpush2.msra.mxu0 0.0
    %525 = vmatprep.subr.mxu0 0.0
    %526 = vmatpush2.msra.mxu0 0.0
    %527 = vmatprep.subr.mxu0 0.0
    %528 = vmatpush2.msra.mxu0 0.0
    %529 = vmatprep.subr.mxu0 0.0
    %530 = vmatpush2.msra.mxu0 0.0
    %531 = vmatprep.subr.mxu0 0.0
    %532 = vmatpush2.msra.mxu0 0.0
    %533 = vmatprep.subr.mxu0 0.0
    %534 = vmatpush2.msra.mxu0 0.0
    %535 = vmatprep.subr.mxu0 0.0
    %536 = vmatpush2.msra.mxu0 0.0
    %537 = vmatprep.subr.mxu0 0.0
    %538 = vmatpush2.msra.mxu0 0.0
    %539 = vmatprep.subr.mxu0 0.0
    %540 = vmatpush2.msra.mxu0 0.0
    %541 = vmatprep.subr.mxu0 0.0
    %542 = vmatpush2.msra.mxu0 0.0
    %543 = vmatprep.subr.mxu0 0.0
    %544 = vmatpush2.msra.mxu0 0.0
    %545 = vmatprep.subr.mxu0 0.0
    %546 = vmatpush2.msra.mxu0 0.0
    %547 = vmatprep.subr.mxu0 0.0
    %548 = vmatpush2.msra.mxu0 0.0
    %549 = vmatprep.subr.mxu0 0.0
    %550 = vmatpush2.msra.mxu0 0.0
    %551 = vmatprep.mubr.f32.mxu0 0.0
    %552 = vmatmul.mubr.f32.gmra.mxu0 %v485
    %v553 = vpop.f32.mrf.mxu0
    %v554 = vadd.f32 %v159, %v553
    %v555 = vpop.f32.mrf.mxu0
    %556 = vdwg.mxu0
    %557 = vmax.xlane.f32.xlu0 %v554
    %v558 = vpop.xlane.xlu0 %557
    %v559 = vsub.f32 %v554, %v558
    %v560 = vmul.f32 %v559, 1.442695
    %v561 = vpow.pop %v560
    %562 = vadd.xlane.f32.xlu0 %v561
    %v563 = vpop.xlane.xlu0 %562
    %v564 = vlog2.pop %v563
    %v565 = vmul.f32 %v564, 0.6931472
    %v566 = vsub.f32 %v559, %v565
    %s567 = scalar_lea.vmem [#allocation10], 16
    %568 = vst [vmem:[%s567] sm:$0xff] %v566
    %s569 = scalar_lea.vmem [#allocation4], 24
    %v570 = vld [vmem:[%s569] sm:$0xff]
    %v571 = vpack.c.bf16 %v481, %v481
    %573 = vrot.lane.b32.xlu0 %v571, 32
    %v574 = vpop.permute.xlu0 %573
    %v576 = vsel %vm82, %v574, 0
    %578 = vmatprep.subr.bf16.mxu0 0
    %579 = vmatpush1.bf16.msra.mxu0 0
    %580 = vmatprep.subr.bf16.mxu0 0
    %581 = vmatpush1.bf16.msra.mxu0 0
    %582 = vmatprep.subr.bf16.mxu0 0
    %583 = vmatpush1.bf16.msra.mxu0 0
    %584 = vmatprep.subr.bf16.mxu0 0
    %585 = vmatpush1.bf16.msra.mxu0 0
    %586 = vmatprep.subr.bf16.mxu0 0
    %587 = vmatpush1.bf16.msra.mxu0 0
    %588 = vmatprep.subr.bf16.mxu0 0
    %589 = vmatpush1.bf16.msra.mxu0 0
    %590 = vmatprep.subr.bf16.mxu0 0
    %591 = vmatpush1.bf16.msra.mxu0 %v72
    %592 = vmatprep.subr.bf16.mxu0 0
    %593 = vmatpush1.bf16.msra.mxu0 %v71
    %594 = vmatprep.subr.bf16.mxu0 0
    %595 = vmatpush2.bf16.msra.mxu0 0
    %596 = vmatprep.subr.bf16.mxu0 0
    %597 = vmatpush2.bf16.msra.mxu0 0
    %598 = vmatprep.subr.bf16.mxu0 0
    %599 = vmatpush2.bf16.msra.mxu0 0
    %600 = vmatprep.subr.bf16.mxu0 0
    %601 = vmatpush2.bf16.msra.mxu0 0
    %602 = vmatprep.subr.bf16.mxu0 0
    %603 = vmatpush2.bf16.msra.mxu0 0
    %604 = vmatprep.subr.bf16.mxu0 0
    %605 = vmatpush2.bf16.msra.mxu0 0
    %606 = vmatprep.subr.bf16.mxu0 0
    %607 = vmatpush2.bf16.msra.mxu0 0
    %608 = vmatprep.subr.bf16.mxu0 0
    %609 = vmatpush2.bf16.msra.mxu0 0
    %610 = vmatprep.mubr.bf16.mxu0 0
    %611 = vmatmul.mubr.bf16.gmra.mxu0 %v576
    %v612 = vpop.f32.mrf.mxu0
    %v613 = vadd.f32 0.0, %v612
    %v614 = vpop.f32.mrf.mxu0
    %v615 = vpop.f32.mrf.mxu0
    %v616 = vpop.f32.mrf.mxu0
    %617 = vdwg.mxu0
    %v618 = vadd.f32 %v570, %v613
    %v619 = vxor.u32 %v618, 2147483648
    %v620 = vmul.f32 %v619, 1.442695
    %v621 = vpow.pop %v620
    %v622 = vadd.f32 %v621, 1.0
    %v623 = vrcp.pop %v622
    %v624 = vmul.f32 1.0, %v623
    %v625 = vtanh.pop %v618
    %v626 = vmul.f32 %v624, %v475
    %628 = vrot.lane.b32.xlu0 %v625, 64
    %v629 = vpop.permute.xlu0 %628
    %v631 = vmul.f32 %v624, %v629
    %633 = vrot.lane.b32.xlu0 %v631, 32
    %v634 = vpop.permute.xlu0 %633
    %v636 = vadd.f32 %v626, %v634
    %v637 = vtanh.pop %v636
    %639 = vrot.lane.b32.xlu0 %v637, 64
    %v640 = vpop.permute.xlu0 %639
    %v642 = vmul.f32 %v624, %v640
    %644 = vrot.lane.b32.xlu0 %v642, 32
    %v645 = vpop.permute.xlu0 %644
    %v646 = vsel %vm82, %v645, 0
    %648 = vmatprep.subr.mxu0 0.0
    %649 = vmatpush1.msra.mxu0 0.0
    %650 = vmatprep.subr.mxu0 0.0
    %651 = vmatpush1.msra.mxu0 0.0
    %652 = vmatprep.subr.mxu0 0.0
    %653 = vmatpush1.msra.mxu0 0.0
    %654 = vmatprep.subr.mxu0 0.0
    %655 = vmatpush1.msra.mxu0 0.0
    %656 = vmatprep.subr.mxu0 0.0
    %657 = vmatpush1.msra.mxu0 0.0
    %658 = vmatprep.subr.mxu0 0.0
    %659 = vmatpush1.msra.mxu0 0.0
    %660 = vmatprep.subr.mxu0 0.0
    %661 = vmatpush1.msra.mxu0 0.0
    %662 = vmatprep.subr.mxu0 0.0
    %663 = vmatpush1.msra.mxu0 0.0
    %664 = vmatprep.subr.mxu0 0.0
    %665 = vmatpush1.msra.mxu0 0.0
    %666 = vmatprep.subr.mxu0 0.0
    %667 = vmatpush1.msra.mxu0 0.0
    %668 = vmatprep.subr.mxu0 0.0
    %669 = vmatpush1.msra.mxu0 0.0
    %670 = vmatprep.subr.mxu0 0.0
    %671 = vmatpush1.msra.mxu0 0.0
    %672 = vmatprep.subr.mxu0 0.0
    %673 = vmatpush1.msra.mxu0 %v76
    %674 = vmatprep.subr.mxu0 0.0
    %675 = vmatpush1.msra.mxu0 %v75
    %676 = vmatprep.subr.mxu0 0.0
    %677 = vmatpush1.msra.mxu0 %v74
    %678 = vmatprep.subr.mxu0 0.0
    %679 = vmatpush1.msra.mxu0 %v73
    %680 = vmatprep.subr.mxu0 0.0
    %681 = vmatpush2.msra.mxu0 0.0
    %682 = vmatprep.subr.mxu0 0.0
    %683 = vmatpush2.msra.mxu0 0.0
    %684 = vmatprep.subr.mxu0 0.0
    %685 = vmatpush2.msra.mxu0 0.0
    %686 = vmatprep.subr.mxu0 0.0
    %687 = vmatpush2.msra.mxu0 0.0
    %688 = vmatprep.subr.mxu0 0.0
    %689 = vmatpush2.msra.mxu0 0.0
    %690 = vmatprep.subr.mxu0 0.0
    %691 = vmatpush2.msra.mxu0 0.0
    %692 = vmatprep.subr.mxu0 0.0
    %693 = vmatpush2.msra.mxu0 0.0
    %694 = vmatprep.subr.mxu0 0.0
    %695 = vmatpush2.msra.mxu0 0.0
    %696 = vmatprep.subr.mxu0 0.0
    %697 = vmatpush2.msra.mxu0 0.0
    %698 = vmatprep.subr.mxu0 0.0
    %699 = vmatpush2.msra.mxu0 0.0
    %700 = vmatprep.subr.mxu0 0.0
    %701 = vmatpush2.msra.mxu0 0.0
    %702 = vmatprep.subr.mxu0 0.0
    %703 = vmatpush2.msra.mxu0 0.0
    %704 = vmatprep.subr.mxu0 0.0
    %705 = vmatpush2.msra.mxu0 0.0
    %706 = vmatprep.subr.mxu0 0.0
    %707 = vmatpush2.msra.mxu0 0.0
    %708 = vmatprep.subr.mxu0 0.0
    %709 = vmatpush2.msra.mxu0 0.0
    %710 = vmatprep.subr.mxu0 0.0
    %711 = vmatpush2.msra.mxu0 0.0
    %712 = vmatprep.mubr.f32.mxu0 0.0
    %713 = vmatmul.mubr.f32.gmra.mxu0 %v646
    %v714 = vpop.f32.mrf.mxu0
    %v715 = vadd.f32 %v159, %v714
    %v716 = vpop.f32.mrf.mxu0
    %717 = vdwg.mxu0
    %718 = vmax.xlane.f32.xlu0 %v715
    %v719 = vpop.xlane.xlu0 %718
    %v720 = vsub.f32 %v715, %v719
    %v721 = vmul.f32 %v720, 1.442695
    %v722 = vpow.pop %v721
    %723 = vadd.xlane.f32.xlu0 %v722
    %v724 = vpop.xlane.xlu0 %723
    %v725 = vlog2.pop %v724
    %v726 = vmul.f32 %v725, 0.6931472
    %v727 = vsub.f32 %v720, %v726
    %s728 = scalar_lea.vmem [#allocation10], 24
    %729 = vst [vmem:[%s728] sm:$0xff] %v727
    %s730 = scalar_lea.vmem [#allocation4], 32
    %v731 = vld [vmem:[%s730] sm:$0xff]
    %v732 = vpack.c.bf16 %v642, %v642
    %734 = vrot.lane.b32.xlu0 %v732, 32
    %v735 = vpop.permute.xlu0 %734
    %v737 = vsel %vm82, %v735, 0
    %739 = vmatprep.subr.bf16.mxu0 0
    %740 = vmatpush1.bf16.msra.mxu0 0
    %741 = vmatprep.subr.bf16.mxu0 0
    %742 = vmatpush1.bf16.msra.mxu0 0
    %743 = vmatprep.subr.bf16.mxu0 0
    %744 = vmatpush1.bf16.msra.mxu0 0
    %745 = vmatprep.subr.bf16.mxu0 0
    %746 = vmatpush1.bf16.msra.mxu0 0
    %747 = vmatprep.subr.bf16.mxu0 0
    %748 = vmatpush1.bf16.msra.mxu0 0
    %749 = vmatprep.subr.bf16.mxu0 0
    %750 = vmatpush1.bf16.msra.mxu0 0
    %751 = vmatprep.subr.bf16.mxu0 0
    %752 = vmatpush1.bf16.msra.mxu0 %v72
    %753 = vmatprep.subr.bf16.mxu0 0
    %754 = vmatpush1.bf16.msra.mxu0 %v71
    %755 = vmatprep.subr.bf16.mxu0 0
    %756 = vmatpush2.bf16.msra.mxu0 0
    %757 = vmatprep.subr.bf16.mxu0 0
    %758 = vmatpush2.bf16.msra.mxu0 0
    %759 = vmatprep.subr.bf16.mxu0 0
    %760 = vmatpush2.bf16.msra.mxu0 0
    %761 = vmatprep.subr.bf16.mxu0 0
    %762 = vmatpush2.bf16.msra.mxu0 0
    %763 = vmatprep.subr.bf16.mxu0 0
    %764 = vmatpush2.bf16.msra.mxu0 0
    %765 = vmatprep.subr.bf16.mxu0 0
    %766 = vmatpush2.bf16.msra.mxu0 0
    %767 = vmatprep.subr.bf16.mxu0 0
    %768 = vmatpush2.bf16.msra.mxu0 0
    %769 = vmatprep.subr.bf16.mxu0 0
    %770 = vmatpush2.bf16.msra.mxu0 0
    %771 = vmatprep.mubr.bf16.mxu0 0
    %772 = vmatmul.mubr.bf16.gmra.mxu0 %v737
    %v773 = vpop.f32.mrf.mxu0
    %v774 = vadd.f32 0.0, %v773
    %v775 = vpop.f32.mrf.mxu0
    %v776 = vpop.f32.mrf.mxu0
    %v777 = vpop.f32.mrf.mxu0
    %778 = vdwg.mxu0
    %v779 = vadd.f32 %v731, %v774
    %v780 = vxor.u32 %v779, 2147483648
    %v781 = vmul.f32 %v780, 1.442695
    %v782 = vpow.pop %v781
    %v783 = vadd.f32 %v782, 1.0
    %v784 = vrcp.pop %v783
    %v785 = vmul.f32 1.0, %v784
    %v786 = vtanh.pop %v779
    %v787 = vmul.f32 %v785, %v636
    %789 = vrot.lane.b32.xlu0 %v786, 64
    %v790 = vpop.permute.xlu0 %789
    %v792 = vmul.f32 %v785, %v790
    %794 = vrot.lane.b32.xlu0 %v792, 32
    %v795 = vpop.permute.xlu0 %794
    %v797 = vadd.f32 %v787, %v795
    %v798 = vtanh.pop %v797
    %800 = vrot.lane.b32.xlu0 %v798, 64
    %v801 = vpop.permute.xlu0 %800
    %v803 = vmul.f32 %v785, %v801
    %805 = vrot.lane.b32.xlu0 %v803, 32
    %v806 = vpop.permute.xlu0 %805
    %v807 = vsel %vm82, %v806, 0
    %809 = vmatprep.subr.mxu0 0.0
    %810 = vmatpush1.msra.mxu0 0.0
    %811 = vmatprep.subr.mxu0 0.0
    %812 = vmatpush1.msra.mxu0 0.0
    %813 = vmatprep.subr.mxu0 0.0
    %814 = vmatpush1.msra.mxu0 0.0
    %815 = vmatprep.subr.mxu0 0.0
    %816 = vmatpush1.msra.mxu0 0.0
    %817 = vmatprep.subr.mxu0 0.0
    %818 = vmatpush1.msra.mxu0 0.0
    %819 = vmatprep.subr.mxu0 0.0
    %820 = vmatpush1.msra.mxu0 0.0
    %821 = vmatprep.subr.mxu0 0.0
    %822 = vmatpush1.msra.mxu0 0.0
    %823 = vmatprep.subr.mxu0 0.0
    %824 = vmatpush1.msra.mxu0 0.0
    %825 = vmatprep.subr.mxu0 0.0
    %826 = vmatpush1.msra.mxu0 0.0
    %827 = vmatprep.subr.mxu0 0.0
    %828 = vmatpush1.msra.mxu0 0.0
    %829 = vmatprep.subr.mxu0 0.0
    %830 = vmatpush1.msra.mxu0 0.0
    %831 = vmatprep.subr.mxu0 0.0
    %832 = vmatpush1.msra.mxu0 0.0
    %833 = vmatprep.subr.mxu0 0.0
    %834 = vmatpush1.msra.mxu0 %v76
    %835 = vmatprep.subr.mxu0 0.0
    %836 = vmatpush1.msra.mxu0 %v75
    %837 = vmatprep.subr.mxu0 0.0
    %838 = vmatpush1.msra.mxu0 %v74
    %839 = vmatprep.subr.mxu0 0.0
    %840 = vmatpush1.msra.mxu0 %v73
    %841 = vmatprep.subr.mxu0 0.0
    %842 = vmatpush2.msra.mxu0 0.0
    %843 = vmatprep.subr.mxu0 0.0
    %844 = vmatpush2.msra.mxu0 0.0
    %845 = vmatprep.subr.mxu0 0.0
    %846 = vmatpush2.msra.mxu0 0.0
    %847 = vmatprep.subr.mxu0 0.0
    %848 = vmatpush2.msra.mxu0 0.0
    %849 = vmatprep.subr.mxu0 0.0
    %850 = vmatpush2.msra.mxu0 0.0
    %851 = vmatprep.subr.mxu0 0.0
    %852 = vmatpush2.msra.mxu0 0.0
    %853 = vmatprep.subr.mxu0 0.0
    %854 = vmatpush2.msra.mxu0 0.0
    %855 = vmatprep.subr.mxu0 0.0
    %856 = vmatpush2.msra.mxu0 0.0
    %857 = vmatprep.subr.mxu0 0.0
    %858 = vmatpush2.msra.mxu0 0.0
    %859 = vmatprep.subr.mxu0 0.0
    %860 = vmatpush2.msra.mxu0 0.0
    %861 = vmatprep.subr.mxu0 0.0
    %862 = vmatpush2.msra.mxu0 0.0
    %863 = vmatprep.subr.mxu0 0.0
    %864 = vmatpush2.msra.mxu0 0.0
    %865 = vmatprep.subr.mxu0 0.0
    %866 = vmatpush2.msra.mxu0 0.0
    %867 = vmatprep.subr.mxu0 0.0
    %868 = vmatpush2.msra.mxu0 0.0
    %869 = vmatprep.subr.mxu0 0.0
    %870 = vmatpush2.msra.mxu0 0.0
    %871 = vmatprep.subr.mxu0 0.0
    %872 = vmatpush2.msra.mxu0 0.0
    %873 = vmatprep.mubr.f32.mxu0 0.0
    %874 = vmatmul.mubr.f32.gmra.mxu0 %v807
    %v875 = vpop.f32.mrf.mxu0
    %v876 = vadd.f32 %v159, %v875
    %v877 = vpop.f32.mrf.mxu0
    %878 = vdwg.mxu0
    %879 = vmax.xlane.f32.xlu0 %v876
    %v880 = vpop.xlane.xlu0 %879
    %v881 = vsub.f32 %v876, %v880
    %v882 = vmul.f32 %v881, 1.442695
    %v883 = vpow.pop %v882
    %884 = vadd.xlane.f32.xlu0 %v883
    %v885 = vpop.xlane.xlu0 %884
    %v886 = vlog2.pop %v885
    %v887 = vmul.f32 %v886, 0.6931472
    %v888 = vsub.f32 %v881, %v887
    %s889 = scalar_lea.vmem [#allocation10], 32
    %890 = vst [vmem:[%s889] sm:$0xff] %v888
    %s891 = scalar_lea.vmem [#allocation4], 40
    %v892 = vld [vmem:[%s891] sm:$0xff]
    %v893 = vpack.c.bf16 %v803, %v803
    %895 = vrot.lane.b32.xlu0 %v893, 32
    %v896 = vpop.permute.xlu0 %895
    %v898 = vsel %vm82, %v896, 0
    %900 = vmatprep.subr.bf16.mxu0 0
    %901 = vmatpush1.bf16.msra.mxu0 0
    %902 = vmatprep.subr.bf16.mxu0 0
    %903 = vmatpush1.bf16.msra.mxu0 0
    %904 = vmatprep.subr.bf16.mxu0 0
    %905 = vmatpush1.bf16.msra.mxu0 0
    %906 = vmatprep.subr.bf16.mxu0 0
    %907 = vmatpush1.bf16.msra.mxu0 0
    %908 = vmatprep.subr.bf16.mxu0 0
    %909 = vmatpush1.bf16.msra.mxu0 0
    %910 = vmatprep.subr.bf16.mxu0 0
    %911 = vmatpush1.bf16.msra.mxu0 0
    %912 = vmatprep.subr.bf16.mxu0 0
    %913 = vmatpush1.bf16.msra.mxu0 %v72
    %914 = vmatprep.subr.bf16.mxu0 0
    %915 = vmatpush1.bf16.msra.mxu0 %v71
    %916 = vmatprep.subr.bf16.mxu0 0
    %917 = vmatpush2.bf16.msra.mxu0 0
    %918 = vmatprep.subr.bf16.mxu0 0
    %919 = vmatpush2.bf16.msra.mxu0 0
    %920 = vmatprep.subr.bf16.mxu0 0
    %921 = vmatpush2.bf16.msra.mxu0 0
    %922 = vmatprep.subr.bf16.mxu0 0
    %923 = vmatpush2.bf16.msra.mxu0 0
    %924 = vmatprep.subr.bf16.mxu0 0
    %925 = vmatpush2.bf16.msra.mxu0 0
    %926 = vmatprep.subr.bf16.mxu0 0
    %927 = vmatpush2.bf16.msra.mxu0 0
    %928 = vmatprep.subr.bf16.mxu0 0
    %929 = vmatpush2.bf16.msra.mxu0 0
    %930 = vmatprep.subr.bf16.mxu0 0
    %931 = vmatpush2.bf16.msra.mxu0 0
    %932 = vmatprep.mubr.bf16.mxu0 0
    %933 = vmatmul.mubr.bf16.gmra.mxu0 %v898
    %v934 = vpop.f32.mrf.mxu0
    %v935 = vadd.f32 0.0, %v934
    %v936 = vpop.f32.mrf.mxu0
    %v937 = vpop.f32.mrf.mxu0
    %v938 = vpop.f32.mrf.mxu0
    %939 = vdwg.mxu0
    %v940 = vadd.f32 %v892, %v935
    %v941 = vxor.u32 %v940, 2147483648
    %v942 = vmul.f32 %v941, 1.442695
    %v943 = vpow.pop %v942
    %v944 = vadd.f32 %v943, 1.0
    %v945 = vrcp.pop %v944
    %v946 = vmul.f32 1.0, %v945
    %v947 = vtanh.pop %v940
    %v948 = vmul.f32 %v946, %v797
    %950 = vrot.lane.b32.xlu0 %v947, 64
    %v951 = vpop.permute.xlu0 %950
    %v953 = vmul.f32 %v946, %v951
    %955 = vrot.lane.b32.xlu0 %v953, 32
    %v956 = vpop.permute.xlu0 %955
    %v958 = vadd.f32 %v948, %v956
    %v959 = vtanh.pop %v958
    %961 = vrot.lane.b32.xlu0 %v959, 64
    %v962 = vpop.permute.xlu0 %961
    %v964 = vmul.f32 %v946, %v962
    %966 = vrot.lane.b32.xlu0 %v964, 32
    %v967 = vpop.permute.xlu0 %966
    %v968 = vsel %vm82, %v967, 0
    %970 = vmatprep.subr.mxu0 0.0
    %971 = vmatpush1.msra.mxu0 0.0
    %972 = vmatprep.subr.mxu0 0.0
    %973 = vmatpush1.msra.mxu0 0.0
    %974 = vmatprep.subr.mxu0 0.0
    %975 = vmatpush1.msra.mxu0 0.0
    %976 = vmatprep.subr.mxu0 0.0
    %977 = vmatpush1.msra.mxu0 0.0
    %978 = vmatprep.subr.mxu0 0.0
    %979 = vmatpush1.msra.mxu0 0.0
    %980 = vmatprep.subr.mxu0 0.0
    %981 = vmatpush1.msra.mxu0 0.0
    %982 = vmatprep.subr.mxu0 0.0
    %983 = vmatpush1.msra.mxu0 0.0
    %984 = vmatprep.subr.mxu0 0.0
    %985 = vmatpush1.msra.mxu0 0.0
    %986 = vmatprep.subr.mxu0 0.0
    %987 = vmatpush1.msra.mxu0 0.0
    %988 = vmatprep.subr.mxu0 0.0
    %989 = vmatpush1.msra.mxu0 0.0
    %990 = vmatprep.subr.mxu0 0.0
    %991 = vmatpush1.msra.mxu0 0.0
    %992 = vmatprep.subr.mxu0 0.0
    %993 = vmatpush1.msra.mxu0 0.0
    %994 = vmatprep.subr.mxu0 0.0
    %995 = vmatpush1.msra.mxu0 %v76
    %996 = vmatprep.subr.mxu0 0.0
    %997 = vmatpush1.msra.mxu0 %v75
    %998 = vmatprep.subr.mxu0 0.0
    %999 = vmatpush1.msra.mxu0 %v74
    %1000 = vmatprep.subr.mxu0 0.0
    %1001 = vmatpush1.msra.mxu0 %v73
    %1002 = vmatprep.subr.mxu0 0.0
    %1003 = vmatpush2.msra.mxu0 0.0
    %1004 = vmatprep.subr.mxu0 0.0
    %1005 = vmatpush2.msra.mxu0 0.0
    %1006 = vmatprep.subr.mxu0 0.0
    %1007 = vmatpush2.msra.mxu0 0.0
    %1008 = vmatprep.subr.mxu0 0.0
    %1009 = vmatpush2.msra.mxu0 0.0
    %1010 = vmatprep.subr.mxu0 0.0
    %1011 = vmatpush2.msra.mxu0 0.0
    %1012 = vmatprep.subr.mxu0 0.0
    %1013 = vmatpush2.msra.mxu0 0.0
    %1014 = vmatprep.subr.mxu0 0.0
    %1015 = vmatpush2.msra.mxu0 0.0
    %1016 = vmatprep.subr.mxu0 0.0
    %1017 = vmatpush2.msra.mxu0 0.0
    %1018 = vmatprep.subr.mxu0 0.0
    %1019 = vmatpush2.msra.mxu0 0.0
    %1020 = vmatprep.subr.mxu0 0.0
    %1021 = vmatpush2.msra.mxu0 0.0
    %1022 = vmatprep.subr.mxu0 0.0
    %1023 = vmatpush2.msra.mxu0 0.0
    %1024 = vmatprep.subr.mxu0 0.0
    %1025 = vmatpush2.msra.mxu0 0.0
    %1026 = vmatprep.subr.mxu0 0.0
    %1027 = vmatpush2.msra.mxu0 0.0
    %1028 = vmatprep.subr.mxu0 0.0
    %1029 = vmatpush2.msra.mxu0 0.0
    %1030 = vmatprep.subr.mxu0 0.0
    %1031 = vmatpush2.msra.mxu0 0.0
    %1032 = vmatprep.subr.mxu0 0.0
    %1033 = vmatpush2.msra.mxu0 0.0
    %1034 = vmatprep.mubr.f32.mxu0 0.0
    %1035 = vmatmul.mubr.f32.gmra.mxu0 %v968
    %v1036 = vpop.f32.mrf.mxu0
    %v1037 = vadd.f32 %v159, %v1036
    %v1038 = vpop.f32.mrf.mxu0
    %1039 = vdwg.mxu0
    %1040 = vmax.xlane.f32.xlu0 %v1037
    %v1041 = vpop.xlane.xlu0 %1040
    %v1042 = vsub.f32 %v1037, %v1041
    %v1043 = vmul.f32 %v1042, 1.442695
    %v1044 = vpow.pop %v1043
    %1045 = vadd.xlane.f32.xlu0 %v1044
    %v1046 = vpop.xlane.xlu0 %1045
    %v1047 = vlog2.pop %v1046
    %v1048 = vmul.f32 %v1047, 0.6931472
    %v1049 = vsub.f32 %v1042, %v1048
    %s1050 = scalar_lea.vmem [#allocation10], 40
    %1051 = vst [vmem:[%s1050] sm:$0xff] %v1049
    %s1052 = scalar_lea.vmem [#allocation4], 48
    %v1053 = vld [vmem:[%s1052] sm:$0xff]
    %v1054 = vpack.c.bf16 %v964, %v964
    %1056 = vrot.lane.b32.xlu0 %v1054, 32
    %v1057 = vpop.permute.xlu0 %1056
    %v1059 = vsel %vm82, %v1057, 0
    %1061 = vmatprep.subr.bf16.mxu0 0
    %1062 = vmatpush1.bf16.msra.mxu0 0
    %1063 = vmatprep.subr.bf16.mxu0 0
    %1064 = vmatpush1.bf16.msra.mxu0 0
    %1065 = vmatprep.subr.bf16.mxu0 0
    %1066 = vmatpush1.bf16.msra.mxu0 0
    %1067 = vmatprep.subr.bf16.mxu0 0
    %1068 = vmatpush1.bf16.msra.mxu0 0
    %1069 = vmatprep.subr.bf16.mxu0 0
    %1070 = vmatpush1.bf16.msra.mxu0 0
    %1071 = vmatprep.subr.bf16.mxu0 0
    %1072 = vmatpush1.bf16.msra.mxu0 0
    %1073 = vmatprep.subr.bf16.mxu0 0
    %1074 = vmatpush1.bf16.msra.mxu0 %v72
    %1075 = vmatprep.subr.bf16.mxu0 0
    %1076 = vmatpush1.bf16.msra.mxu0 %v71
    %1077 = vmatprep.subr.bf16.mxu0 0
    %1078 = vmatpush2.bf16.msra.mxu0 0
    %1079 = vmatprep.subr.bf16.mxu0 0
    %1080 = vmatpush2.bf16.msra.mxu0 0
    %1081 = vmatprep.subr.bf16.mxu0 0
    %1082 = vmatpush2.bf16.msra.mxu0 0
    %1083 = vmatprep.subr.bf16.mxu0 0
    %1084 = vmatpush2.bf16.msra.mxu0 0
    %1085 = vmatprep.subr.bf16.mxu0 0
    %1086 = vmatpush2.bf16.msra.mxu0 0
    %1087 = vmatprep.subr.bf16.mxu0 0
    %1088 = vmatpush2.bf16.msra.mxu0 0
    %1089 = vmatprep.subr.bf16.mxu0 0
    %1090 = vmatpush2.bf16.msra.mxu0 0
    %1091 = vmatprep.subr.bf16.mxu0 0
    %1092 = vmatpush2.bf16.msra.mxu0 0
    %1093 = vmatprep.mubr.bf16.mxu0 0
    %1094 = vmatmul.mubr.bf16.gmra.mxu0 %v1059
    %v1095 = vpop.f32.mrf.mxu0
    %v1096 = vadd.f32 0.0, %v1095
    %v1097 = vpop.f32.mrf.mxu0
    %v1098 = vpop.f32.mrf.mxu0
    %v1099 = vpop.f32.mrf.mxu0
    %1100 = vdwg.mxu0
    %v1101 = vadd.f32 %v1053, %v1096
    %v1102 = vxor.u32 %v1101, 2147483648
    %v1103 = vmul.f32 %v1102, 1.442695
    %v1104 = vpow.pop %v1103
    %v1105 = vadd.f32 %v1104, 1.0
    %v1106 = vrcp.pop %v1105
    %v1107 = vmul.f32 1.0, %v1106
    %v1108 = vtanh.pop %v1101
    %v1109 = vmul.f32 %v1107, %v958
    %1111 = vrot.lane.b32.xlu0 %v1108, 64
    %v1112 = vpop.permute.xlu0 %1111
    %v1114 = vmul.f32 %v1107, %v1112
    %1116 = vrot.lane.b32.xlu0 %v1114, 32
    %v1117 = vpop.permute.xlu0 %1116
    %v1119 = vadd.f32 %v1109, %v1117
    %v1120 = vtanh.pop %v1119
    %1122 = vrot.lane.b32.xlu0 %v1120, 64
    %v1123 = vpop.permute.xlu0 %1122
    %v1125 = vmul.f32 %v1107, %v1123
    %1127 = vrot.lane.b32.xlu0 %v1125, 32
    %v1128 = vpop.permute.xlu0 %1127
    %v1129 = vsel %vm82, %v1128, 0
    %1131 = vmatprep.subr.mxu0 0.0
    %1132 = vmatpush1.msra.mxu0 0.0
    %1133 = vmatprep.subr.mxu0 0.0
    %1134 = vmatpush1.msra.mxu0 0.0
    %1135 = vmatprep.subr.mxu0 0.0
    %1136 = vmatpush1.msra.mxu0 0.0
    %1137 = vmatprep.subr.mxu0 0.0
    %1138 = vmatpush1.msra.mxu0 0.0
    %1139 = vmatprep.subr.mxu0 0.0
    %1140 = vmatpush1.msra.mxu0 0.0
    %1141 = vmatprep.subr.mxu0 0.0
    %1142 = vmatpush1.msra.mxu0 0.0
    %1143 = vmatprep.subr.mxu0 0.0
    %1144 = vmatpush1.msra.mxu0 0.0
    %1145 = vmatprep.subr.mxu0 0.0
    %1146 = vmatpush1.msra.mxu0 0.0
    %1147 = vmatprep.subr.mxu0 0.0
    %1148 = vmatpush1.msra.mxu0 0.0
    %1149 = vmatprep.subr.mxu0 0.0
    %1150 = vmatpush1.msra.mxu0 0.0
    %1151 = vmatprep.subr.mxu0 0.0
    %1152 = vmatpush1.msra.mxu0 0.0
    %1153 = vmatprep.subr.mxu0 0.0
    %1154 = vmatpush1.msra.mxu0 0.0
    %1155 = vmatprep.subr.mxu0 0.0
    %1156 = vmatpush1.msra.mxu0 %v76
    %1157 = vmatprep.subr.mxu0 0.0
    %1158 = vmatpush1.msra.mxu0 %v75
    %1159 = vmatprep.subr.mxu0 0.0
    %1160 = vmatpush1.msra.mxu0 %v74
    %1161 = vmatprep.subr.mxu0 0.0
    %1162 = vmatpush1.msra.mxu0 %v73
    %1163 = vmatprep.subr.mxu0 0.0
    %1164 = vmatpush2.msra.mxu0 0.0
    %1165 = vmatprep.subr.mxu0 0.0
    %1166 = vmatpush2.msra.mxu0 0.0
    %1167 = vmatprep.subr.mxu0 0.0
    %1168 = vmatpush2.msra.mxu0 0.0
    %1169 = vmatprep.subr.mxu0 0.0
    %1170 = vmatpush2.msra.mxu0 0.0
    %1171 = vmatprep.subr.mxu0 0.0
    %1172 = vmatpush2.msra.mxu0 0.0
    %1173 = vmatprep.subr.mxu0 0.0
    %1174 = vmatpush2.msra.mxu0 0.0
    %1175 = vmatprep.subr.mxu0 0.0
    %1176 = vmatpush2.msra.mxu0 0.0
    %1177 = vmatprep.subr.mxu0 0.0
    %1178 = vmatpush2.msra.mxu0 0.0
    %1179 = vmatprep.subr.mxu0 0.0
    %1180 = vmatpush2.msra.mxu0 0.0
    %1181 = vmatprep.subr.mxu0 0.0
    %1182 = vmatpush2.msra.mxu0 0.0
    %1183 = vmatprep.subr.mxu0 0.0
    %1184 = vmatpush2.msra.mxu0 0.0
    %1185 = vmatprep.subr.mxu0 0.0
    %1186 = vmatpush2.msra.mxu0 0.0
    %1187 = vmatprep.subr.mxu0 0.0
    %1188 = vmatpush2.msra.mxu0 0.0
    %1189 = vmatprep.subr.mxu0 0.0
    %1190 = vmatpush2.msra.mxu0 0.0
    %1191 = vmatprep.subr.mxu0 0.0
    %1192 = vmatpush2.msra.mxu0 0.0
    %1193 = vmatprep.subr.mxu0 0.0
    %1194 = vmatpush2.msra.mxu0 0.0
    %1195 = vmatprep.mubr.f32.mxu0 0.0
    %1196 = vmatmul.mubr.f32.gmra.mxu0 %v1129
    %v1197 = vpop.f32.mrf.mxu0
    %v1198 = vadd.f32 %v159, %v1197
    %v1199 = vpop.f32.mrf.mxu0
    %1200 = vdwg.mxu0
    %1201 = vmax.xlane.f32.xlu0 %v1198
    %v1202 = vpop.xlane.xlu0 %1201
    %v1203 = vsub.f32 %v1198, %v1202
    %v1204 = vmul.f32 %v1203, 1.442695
    %v1205 = vpow.pop %v1204
    %1206 = vadd.xlane.f32.xlu0 %v1205
    %v1207 = vpop.xlane.xlu0 %1206
    %v1208 = vlog2.pop %v1207
    %v1209 = vmul.f32 %v1208, 0.6931472
    %v1210 = vsub.f32 %v1203, %v1209
    %s1211 = scalar_lea.vmem [#allocation10], 48
    %1212 = vst [vmem:[%s1211] sm:$0xff] %v1210
    %s1213 = scalar_lea.vmem [#allocation4], 56
    %v1214 = vld [vmem:[%s1213] sm:$0xff]
    %v1215 = vpack.c.bf16 %v1125, %v1125
    %1217 = vrot.lane.b32.xlu0 %v1215, 32
    %v1218 = vpop.permute.xlu0 %1217
    %v1220 = vsel %vm82, %v1218, 0
    %1222 = vmatprep.subr.bf16.mxu0 0
    %1223 = vmatpush1.bf16.msra.mxu0 0
    %1224 = vmatprep.subr.bf16.mxu0 0
    %1225 = vmatpush1.bf16.msra.mxu0 0
    %1226 = vmatprep.subr.bf16.mxu0 0
    %1227 = vmatpush1.bf16.msra.mxu0 0
    %1228 = vmatprep.subr.bf16.mxu0 0
    %1229 = vmatpush1.bf16.msra.mxu0 0
    %1230 = vmatprep.subr.bf16.mxu0 0
    %1231 = vmatpush1.bf16.msra.mxu0 0
    %1232 = vmatprep.subr.bf16.mxu0 0
    %1233 = vmatpush1.bf16.msra.mxu0 0
    %1234 = vmatprep.subr.bf16.mxu0 0
    %1235 = vmatpush1.bf16.msra.mxu0 %v72
    %1236 = vmatprep.subr.bf16.mxu0 0
    %1237 = vmatpush1.bf16.msra.mxu0 %v71
    %1238 = vmatprep.subr.bf16.mxu0 0
    %1239 = vmatpush2.bf16.msra.mxu0 0
    %1240 = vmatprep.subr.bf16.mxu0 0
    %1241 = vmatpush2.bf16.msra.mxu0 0
    %1242 = vmatprep.subr.bf16.mxu0 0
    %1243 = vmatpush2.bf16.msra.mxu0 0
    %1244 = vmatprep.subr.bf16.mxu0 0
    %1245 = vmatpush2.bf16.msra.mxu0 0
    %1246 = vmatprep.subr.bf16.mxu0 0
    %1247 = vmatpush2.bf16.msra.mxu0 0
    %1248 = vmatprep.subr.bf16.mxu0 0
    %1249 = vmatpush2.bf16.msra.mxu0 0
    %1250 = vmatprep.subr.bf16.mxu0 0
    %1251 = vmatpush2.bf16.msra.mxu0 0
    %1252 = vmatprep.subr.bf16.mxu0 0
    %1253 = vmatpush2.bf16.msra.mxu0 0
    %1254 = vmatprep.mubr.bf16.mxu0 0
    %1255 = vmatmul.mubr.bf16.gmra.mxu0 %v1220
    %v1256 = vpop.f32.mrf.mxu0
    %v1257 = vadd.f32 0.0, %v1256
    %v1258 = vpop.f32.mrf.mxu0
    %v1259 = vpop.f32.mrf.mxu0
    %v1260 = vpop.f32.mrf.mxu0
    %1261 = vdwg.mxu0
    %v1262 = vadd.f32 %v1214, %v1257
    %v1263 = vxor.u32 %v1262, 2147483648
    %v1264 = vmul.f32 %v1263, 1.442695
    %v1265 = vpow.pop %v1264
    %v1266 = vadd.f32 %v1265, 1.0
    %v1267 = vrcp.pop %v1266
    %v1268 = vmul.f32 1.0, %v1267
    %v1269 = vtanh.pop %v1262
    %v1270 = vmul.f32 %v1268, %v1119
    %1272 = vrot.lane.b32.xlu0 %v1269, 64
    %v1273 = vpop.permute.xlu0 %1272
    %v1275 = vmul.f32 %v1268, %v1273
    %1277 = vrot.lane.b32.xlu0 %v1275, 32
    %v1278 = vpop.permute.xlu0 %1277
    %v1280 = vadd.f32 %v1270, %v1278
    %v1281 = vtanh.pop %v1280
    %1283 = vrot.lane.b32.xlu0 %v1281, 64
    %v1284 = vpop.permute.xlu0 %1283
    %v1286 = vmul.f32 %v1268, %v1284
    %1288 = vrot.lane.b32.xlu0 %v1286, 32
    %v1289 = vpop.permute.xlu0 %1288
    %v1290 = vsel %vm82, %v1289, 0
    %1292 = vmatprep.subr.mxu0 0.0
    %1293 = vmatpush1.msra.mxu0 0.0
    %1294 = vmatprep.subr.mxu0 0.0
    %1295 = vmatpush1.msra.mxu0 0.0
    %1296 = vmatprep.subr.mxu0 0.0
    %1297 = vmatpush1.msra.mxu0 0.0
    %1298 = vmatprep.subr.mxu0 0.0
    %1299 = vmatpush1.msra.mxu0 0.0
    %1300 = vmatprep.subr.mxu0 0.0
    %1301 = vmatpush1.msra.mxu0 0.0
    %1302 = vmatprep.subr.mxu0 0.0
    %1303 = vmatpush1.msra.mxu0 0.0
    %1304 = vmatprep.subr.mxu0 0.0
    %1305 = vmatpush1.msra.mxu0 0.0
    %1306 = vmatprep.subr.mxu0 0.0
    %1307 = vmatpush1.msra.mxu0 0.0
    %1308 = vmatprep.subr.mxu0 0.0
    %1309 = vmatpush1.msra.mxu0 0.0
    %1310 = vmatprep.subr.mxu0 0.0
    %1311 = vmatpush1.msra.mxu0 0.0
    %1312 = vmatprep.subr.mxu0 0.0
    %1313 = vmatpush1.msra.mxu0 0.0
    %1314 = vmatprep.subr.mxu0 0.0
    %1315 = vmatpush1.msra.mxu0 0.0
    %1316 = vmatprep.subr.mxu0 0.0
    %1317 = vmatpush1.msra.mxu0 %v76
    %1318 = vmatprep.subr.mxu0 0.0
    %1319 = vmatpush1.msra.mxu0 %v75
    %1320 = vmatprep.subr.mxu0 0.0
    %1321 = vmatpush1.msra.mxu0 %v74
    %1322 = vmatprep.subr.mxu0 0.0
    %1323 = vmatpush1.msra.mxu0 %v73
    %1324 = vmatprep.subr.mxu0 0.0
    %1325 = vmatpush2.msra.mxu0 0.0
    %1326 = vmatprep.subr.mxu0 0.0
    %1327 = vmatpush2.msra.mxu0 0.0
    %1328 = vmatprep.subr.mxu0 0.0
    %1329 = vmatpush2.msra.mxu0 0.0
    %1330 = vmatprep.subr.mxu0 0.0
    %1331 = vmatpush2.msra.mxu0 0.0
    %1332 = vmatprep.subr.mxu0 0.0
    %1333 = vmatpush2.msra.mxu0 0.0
    %1334 = vmatprep.subr.mxu0 0.0
    %1335 = vmatpush2.msra.mxu0 0.0
    %1336 = vmatprep.subr.mxu0 0.0
    %1337 = vmatpush2.msra.mxu0 0.0
    %1338 = vmatprep.subr.mxu0 0.0
    %1339 = vmatpush2.msra.mxu0 0.0
    %1340 = vmatprep.subr.mxu0 0.0
    %1341 = vmatpush2.msra.mxu0 0.0
    %1342 = vmatprep.subr.mxu0 0.0
    %1343 = vmatpush2.msra.mxu0 0.0
    %1344 = vmatprep.subr.mxu0 0.0
    %1345 = vmatpush2.msra.mxu0 0.0
    %1346 = vmatprep.subr.mxu0 0.0
    %1347 = vmatpush2.msra.mxu0 0.0
    %1348 = vmatprep.subr.mxu0 0.0
    %1349 = vmatpush2.msra.mxu0 0.0
    %1350 = vmatprep.subr.mxu0 0.0
    %1351 = vmatpush2.msra.mxu0 0.0
    %1352 = vmatprep.subr.mxu0 0.0
    %1353 = vmatpush2.msra.mxu0 0.0
    %1354 = vmatprep.subr.mxu0 0.0
    %1355 = vmatpush2.msra.mxu0 0.0
    %1356 = vmatprep.mubr.f32.mxu0 0.0
    %1357 = vmatmul.mubr.f32.gmra.mxu0 %v1290
    %v1358 = vpop.f32.mrf.mxu0
    %v1359 = vadd.f32 %v159, %v1358
    %v1360 = vpop.f32.mrf.mxu0
    %1361 = vdwg.mxu0
    %1362 = vmax.xlane.f32.xlu0 %v1359
    %v1363 = vpop.xlane.xlu0 %1362
    %v1364 = vsub.f32 %v1359, %v1363
    %v1365 = vmul.f32 %v1364, 1.442695
    %v1366 = vpow.pop %v1365
    %1367 = vadd.xlane.f32.xlu0 %v1366
    %v1368 = vpop.xlane.xlu0 %1367
    %v1369 = vlog2.pop %v1368
    %v1370 = vmul.f32 %v1369, 0.6931472
    %v1371 = vsub.f32 %v1364, %v1370
    %s1372 = scalar_lea.vmem [#allocation10], 56
    %1373 = vst [vmem:[%s1372] sm:$0xff] %v1371
    %1375 = vst.msk [vmem:[#allocation2] sm:$0xff] %vm82, %v1289
    %1377 = vrot.lane.b32.xlu0 %v1280, 96
    %v1378 = vpop.permute.xlu0 %1377
    %1380 = vst.msk [vmem:[#allocation3] sm:$0xff] %vm82, %v1378
    // Predicated region
    $region34: #{tpu_custom_call.1} parent=1 // pred_check
      _
    $region35: #{tpu_custom_call.1} parent=1 // pred_check_branch
      %1382 = sbr.rel (0) target = $region37
    $region36: #{tpu_custom_call.1} parent=1 // pred_region
      %s1384 = ssub.s32 1024, 1024
      %1385 = vsyncadd [#allocation6], %s1384
      %s1386 = sshll.u32 [#allocation10], 4
      %s1387 = int_to_ptr.vmem [resolvable:$true] %s1386
      %1392 = dma.vmem_to_hbm [thread:$0]  %s1387, 1024, %s4, [#allocation6], 128, 128, 8
    $region37: #{tpu_custom_call.1} parent=1 // pred_fallthru
      _
    // Predicated region
    $region38: #{tpu_custom_call.1} parent=1 // pred_check
      _
    $region39: #{tpu_custom_call.1} parent=1 // pred_check_branch
      %1394 = sbr.rel (0) target = $region41
    $region40: #{tpu_custom_call.1} parent=1 // pred_region
      %1395 = dma.done [#allocation6], 1024
    $region41: #{tpu_custom_call.1} parent=1 // pred_fallthru
      _
    %1396 = vsyncpa [#allocation5], 1
    %1397 = vsyncpa [#allocation8], 1
    %1398 = vsyncpa [#allocation6], 1

</llo_original>
